<compile_context>
chip_gen: v7x
topology: tpu7x:2x2x1
jax: 0.10.0
libtpu: 0.0.40
codegen_flags: <defaults>
</compile_context>

<pallas_src>
import jax
import jax.numpy as jnp
from jax.experimental import pallas as pl
from jax.experimental.pallas import tpu as pltpu

RWKV_RESCALE_LAYER = 6

# Packed per-layer row-vector layout (rows of the (L, 16, D) "rows" array).
_ROW_LN1, _ROW_LN2 = 0, 1
_ROW_TMR, _ROW_TMK, _ROW_TMV = 2, 3, 4       # att time-mix (order matches [r|k|v])
_ROW_TF, _ROW_TD = 5, 6                      # time_first, time_decay
_ROW_FTMR, _ROW_FTMK = 7, 8                  # ffn time-mix (order matches [r|k])
_N_ROWS_USED, _N_ROWS_PAD = 9, 16            # padded to a sublane multiple


def _sigmoid(z):
    return 1.0 / (1.0 + jnp.exp(-z))


def _ln(x, w):
    # Matches the module's custom LN exactly: RMS-style, no mean subtraction,
    # no bias:  x * rsqrt(mean(x*x) + 1e-5) * weight.
    norm = jnp.mean(x * x, axis=-1, keepdims=True)
    return w * (x * jax.lax.rsqrt(norm + 1e-5))


# --------------------------- per-layer kernel ---------------------------
def rwkv_layer_kernel(x_emb_ref, state_ref, ln0_ref, rows_ref,
                      a_rkv_ref, a_ow_ref, f_rk_ref, f_vw_ref, lnout_ref,
                      x_out_ref, state_out_ref, x_sc):
    i = pl.program_id(0)
    n_layer = pl.num_programs(0)
    D = a_ow_ref.shape[0]                     # static

    @pl.when(i == 0)
    def _():                                  # x = LN(emb, ln0) on layer 0
        x_sc[...] = _ln(x_emb_ref[...], ln0_ref[...])

    x = x_sc[...]                             # (1, D) f32, carried across layers

    # ---------------- SA (time mix / WKV recurrence) ----------------
    xx_sa = _ln(x, rows_ref[_ROW_LN1:_ROW_LN1 + 1, :])
    st = state_ref[1:2, :]
    dxs = xx_sa - st                          # xx*tm + st*(1-tm) == st + tm*(xx-st)
    # rows [tmr, tmk, tmv] -> LHS rows [xr, xk, xv] via one broadcast
    lhs = (st + rows_ref[_ROW_TMR:_ROW_TMV + 1, :] * dxs).astype(jnp.bfloat16)
    # fused r/k/v: (3, D) @ (D, 3D) -> take the "diagonal" blocks.
    rkv = jnp.dot(lhs, a_rkv_ref[...], preferred_element_type=jnp.float32)
    r = _sigmoid(rkv[0:1, 0:D])
    k = rkv[1:2, D:2 * D]
    v = rkv[2:3, 2 * D:3 * D]

    aa = state_ref[2:3, :]
    bb = state_ref[3:4, :]
    pp = state_ref[4:5, :]
    tf = rows_ref[_ROW_TF:_ROW_TF + 1, :]
    td = rows_ref[_ROW_TD:_ROW_TD + 1, :]

    ww = tf + k
    p = jnp.maximum(pp, ww)
    e1 = jnp.exp(pp - p)
    e2 = jnp.exp(ww - p)
    a = e1 * aa + e2 * v
    b = e1 * bb + e2

    ww2 = pp + td
    p2 = jnp.maximum(ww2, k)
    e1b = jnp.exp(ww2 - p2)
    e2b = jnp.exp(k - p2)
    aa_new = e1b * aa + e2b * v
    bb_new = e1b * bb + e2b

    # TODO(synk): pl.reciprocal(b, approx=True) moves the divide to the EUP
    # slot for free, but is kept exact to stay bit-close to the f32 reference.
    wkv = a * pl.reciprocal(b)
    x = x + jnp.dot((r * wkv).astype(jnp.bfloat16), a_ow_ref[...],
                    preferred_element_type=jnp.float32)

    # ---------------- FF (channel mix) ----------------
    xx_ff = _ln(x, rows_ref[_ROW_LN2:_ROW_LN2 + 1, :])
    st2 = state_ref[0:1, :]
    dxs2 = xx_ff - st2
    # rows [f_tmr, f_tmk] -> LHS rows [xr, xk]
    lhs2 = (st2 + rows_ref[_ROW_FTMR:_ROW_FTMK + 1, :] * dxs2).astype(jnp.bfloat16)
    # fused rf / kf: (2, D) @ (D, D+F)
    rk = jnp.dot(lhs2, f_rk_ref[...], preferred_element_type=jnp.float32)
    rf = _sigmoid(rk[0:1, 0:D])
    kf = jnp.square(jnp.maximum(rk[1:2, D:], 0.0))
    kv = jnp.dot(kf.astype(jnp.bfloat16), f_vw_ref[...],
                 preferred_element_type=jnp.float32)
    x = x + rf * kv

    # direct row stores of the five state rows: [ffn_x, att_x, aa, bb, pp]
    state_out_ref[0:1, :] = xx_ff
    state_out_ref[1:2, :] = xx_sa
    state_out_ref[2:3, :] = aa_new
    state_out_ref[3:4, :] = bb_new
    state_out_ref[4:5, :] = p2

    # rescale every RWKV_RESCALE_LAYER layers (before ln_out, as in the module)
    x_sc[...] = x

    @pl.when((i + 1) % RWKV_RESCALE_LAYER == 0)
    def _():
        x_sc[...] = x * 0.5

    @pl.when(i == n_layer - 1)
    def _():
        x_out_ref[...] = _ln(x_sc[...], lnout_ref[...])


# --------------------------- vocab head kernel ---------------------------
def head_kernel(x_ref, w_ref, out_ref):
    out_ref[...] = jnp.dot(x_ref[...].astype(jnp.bfloat16), w_ref[...],
                           preferred_element_type=jnp.float32)


def head_projection(x_norm, head_t, *, v_tile=1024):
    D, V = head_t.shape
    assert V % 128 == 0, "vocab must be lane-dense (multiple of 128)"
    v_tile = min(v_tile, V)
    while V % v_tile:
        v_tile //= 2
    # double-buffered bf16 weight tiles + margin
    vmem_limit = min(max(4 * D * v_tile + (8 << 20), 32 << 20), 120 << 20)
    logits = pl.pallas_call(
        head_kernel,
        grid=(V // v_tile,),
        in_specs=[pl.BlockSpec((1, D), lambda j: (0, 0)),
                  pl.BlockSpec((D, v_tile), lambda j: (0, j))],
        out_specs=pl.BlockSpec((1, v_tile), lambda j: (0, j)),
        out_shape=jax.ShapeDtypeStruct((1, V), jnp.float32),
        compiler_params=pltpu.CompilerParams(
            dimension_semantics=("parallel",),
            vmem_limit_bytes=vmem_limit),
    )(x_norm, head_t)
    return logits.reshape(V)


# --------------------------- one-time parameter prep ---------------------------
def prepare_params(params):
    """Pack weights into the streamed layout ONCE at load time.

    Doing the fused-weight concatenation per decode step (as v2 did inside the
    forward) re-materializes ~5*L*D^2 bf16 in HBM every token; keep this out of
    the per-token path.
    """
    L, D = params["ln1"].shape
    row_order = ("ln1", "ln2", "a_tmr", "a_tmk", "a_tmv", "a_tf", "a_td",
                 "f_tmr", "f_tmk")
    rows = jnp.stack([params[n].astype(jnp.float32) for n in row_order], axis=1)
    rows = jnp.pad(rows, ((0, 0), (0, _N_ROWS_PAD - _N_ROWS_USED), (0, 0)))
    prepped = {
        "ln0": params["ln0"],
        "ln_out": params["ln_out"],
        "rows": rows,                                            # (L, 16, D) f32
        "a_rkv_t": jnp.concatenate(
            [params["a_rw_t"], params["a_kw_t"], params["a_vw_t"]], axis=-1),
        "a_ow_t": params["a_ow_t"],
        "f_rk_t": jnp.concatenate([params["f_rw_t"], params["f_kw_t"]], axis=-1),
        "f_vw_t": params["f_vw_t"],
        "head_t": params["head_t"],
    }
    return jax.tree_util.tree_map(jnp.asarray, prepped)


# --------------------------- per-token forward ---------------------------
def ryoko_rnn_forward(prepped, x_emb, state, *, v_tile=1024, weight_buffers=None):
    """One recurrent step.

    Args:
      prepped: output of prepare_params (call once at load time).
      x_emb:  (D,) embedding row for the last context token.
      state:  (L, 5, D) f32 recurrent state (kept in this layout by the caller
              so the in-place alias does not force a copy each step).
      weight_buffers: optional pipeline depth for the 4 big weight streams
              (set to 1 on 64-MiB-VMEM parts like v7x at large D).

    Returns (logits[V], new_state[L, 5, D]).
    """
    L, _, D = prepped["rows"].shape
    F = prepped["f_vw_t"].shape[1]
    x0 = x_emb.reshape(1, D).astype(jnp.float32)

    def big(shape):
        if weight_buffers is None:
            return pl.BlockSpec(shape, lambda i: (i, 0, 0))
        return pl.BlockSpec(shape, lambda i: (i, 0, 0),
                            pipeline_mode=pl.Buffered(weight_buffers))

    full_row = pl.BlockSpec((1, D), lambda i: (0, 0))
    in_specs = [
        full_row,                                             # x_emb
        pl.BlockSpec((None, 5, D), lambda i: (i, 0, 0)),      # state block
        full_row,                                             # ln0
        pl.BlockSpec((None, _N_ROWS_PAD, D), lambda i: (i, 0, 0)),  # packed rows
        big((None, D, 3 * D)),                                # fused r|k|v
        big((None, D, D)),                                    # a_ow_t
        big((None, D, D + F)),                                # fused r|k (ffn)
        big((None, F, D)),                                    # f_vw_t
        full_row,                                             # ln_out
    ]
    out_specs = (
        pl.BlockSpec((1, D), lambda i: (0, 0)),               # LN(x, ln_out)
        pl.BlockSpec((None, 5, D), lambda i: (i, 0, 0)),      # new state block
    )
    out_shape = (
        jax.ShapeDtypeStruct((1, D), jnp.float32),
        jax.ShapeDtypeStruct((L, 5, D), jnp.float32),
    )

    # VMEM budget: the big bf16 weight streams (double-buffered) dominate.
    per_layer_weight_bytes = 2 * (D * 3 * D + D * D + D * (D + F) + F * D)
    n_buf = 2 if weight_buffers is None else weight_buffers
    vmem_limit = min(max(n_buf * per_layer_weight_bytes + (8 << 20), 32 << 20),
                     120 << 20)

    x_norm, new_state = pl.pallas_call(
        rwkv_layer_kernel,
        grid=(L,),
        in_specs=in_specs,
        out_specs=out_specs,
        out_shape=out_shape,
        scratch_shapes=[pltpu.VMEM((1, D), jnp.float32)],
        input_output_aliases={1: 1},          # state updated in place
        compiler_params=pltpu.CompilerParams(
            dimension_semantics=("arbitrary",),
            vmem_limit_bytes=vmem_limit),
    )(x0, state, prepped["ln0"], prepped["rows"],
      prepped["a_rkv_t"], prepped["a_ow_t"], prepped["f_rk_t"],
      prepped["f_vw_t"], prepped["ln_out"])

    logits = head_projection(x_norm, prepped["head_t"], v_tile=v_tile)
    return logits, new_state


# --------------------- pure-JAX reference (sanity check) ---------------------
def ref_forward(params, x_emb, state):
    def ln(x, w):
        return w * (x * jax.lax.rsqrt(jnp.mean(x * x, -1, keepdims=True) + 1e-5))

    def mm(a, w_bf16):   # mirrors kernel precision: bf16 MXU inputs, f32 accum
        return jnp.dot(a.astype(jnp.bfloat16), w_bf16,
                       preferred_element_type=jnp.float32)

    L, D = params["ln1"].shape
    x = x_emb.reshape(1, D).astype(jnp.float32)
    new_state = state
    for i in range(L):
        if i == 0:
            x = ln(x, params["ln0"])
        xx = ln(x, params["ln1"][i:i + 1])
        st = state[5 * i + 1:5 * i + 2]
        dxs = xx - st
        xk = st + params["a_tmk"][i:i + 1] * dxs
        xv = st + params["a_tmv"][i:i + 1] * dxs
        xr = st + params["a_tmr"][i:i + 1] * dxs
        new_state = new_state.at[5 * i + 1].set(xx[0])
        r = _sigmoid(mm(xr, params["a_rw_t"][i]))
        k = mm(xk, params["a_kw_t"][i])
        v = mm(xv, params["a_vw_t"][i])
        aa, bb, pp = (state[5 * i + 2:5 * i + 3], state[5 * i + 3:5 * i + 4],
                      state[5 * i + 4:5 * i + 5])
        tf, td = params["a_tf"][i:i + 1], params["a_td"][i:i + 1]
        ww = tf + k
        p = jnp.maximum(pp, ww)
        e1, e2 = jnp.exp(pp - p), jnp.exp(ww - p)
        a, b = e1 * aa + e2 * v, e1 * bb + e2
        ww2 = pp + td
        p2 = jnp.maximum(ww2, k)
        e1b, e2b = jnp.exp(ww2 - p2), jnp.exp(k - p2)
        new_state = new_state.at[5 * i + 2].set((e1b * aa + e2b * v)[0])
        new_state = new_state.at[5 * i + 3].set((e1b * bb + e2b)[0])
        new_state = new_state.at[5 * i + 4].set(p2[0])
        x = x + mm(r * (a * (1.0 / b)), params["a_ow_t"][i])

        xx = ln(x, params["ln2"][i:i + 1])
        st = state[5 * i + 0:5 * i + 1]
        dxs = xx - st
        xk = st + params["f_tmk"][i:i + 1] * dxs
        xr = st + params["f_tmr"][i:i + 1] * dxs
        new_state = new_state.at[5 * i + 0].set(xx[0])
        rf = _sigmoid(mm(xr, params["f_rw_t"][i]))
        kf = jnp.square(jnp.maximum(mm(xk, params["f_kw_t"][i]), 0.0))
        x = x + rf * mm(kf, params["f_vw_t"][i])
        if (i + 1) % RWKV_RESCALE_LAYER == 0:
            x = x * 0.5
    x = ln(x, params["ln_out"])
    return mm(x, params["head_t"]).reshape(-1), new_state


def init_params(key, n_layer, D, F, V):
    ks = iter(jax.random.split(key, 32))
    nrm = lambda shape, s=0.05: jax.random.normal(next(ks), shape, jnp.float32) * s
    uni = lambda shape, lo, hi: jax.random.uniform(next(ks), shape, jnp.float32, lo, hi)
    bf = lambda a: a.astype(jnp.bfloat16)       # matmul weights stored in bf16
    p = {
        "ln0": uni((1, D), 0.9, 1.1),
        "ln1": uni((n_layer, D), 0.9, 1.1),
        "ln2": uni((n_layer, D), 0.9, 1.1),
        "a_tmk": uni((n_layer, D), 0.0, 1.0),
        "a_tmv": uni((n_layer, D), 0.0, 1.0),
        "a_tmr": uni((n_layer, D), 0.0, 1.0),
        "a_tf": nrm((n_layer, D), 0.2),
        # time_decay is stored raw and transformed to -exp(raw) in __init__
        "a_td": -jnp.exp(nrm((n_layer, D), 0.3)),
        "a_kw_t": bf(nrm((n_layer, D, D))),
        "a_vw_t": bf(nrm((n_layer, D, D))),
        "a_rw_t": bf(nrm((n_layer, D, D))),
        "a_ow_t": bf(nrm((n_layer, D, D))),
        "f_tmk": uni((n_layer, D), 0.0, 1.0),
        "f_tmr": uni((n_layer, D), 0.0, 1.0),
        "f_kw_t": bf(nrm((n_layer, D, F))),
        "f_vw_t": bf(nrm((n_layer, F, D))),
        "f_rw_t": bf(nrm((n_layer, D, D))),
        "ln_out": uni((1, D), 0.9, 1.1),
        "head_t": bf(nrm((D, V))),
    }
    # TODO(synk): the PyTorch __init__'s att.output / ffn.value rescale sits in
    # a dead `elif` branch (never triggers for 'blocks.*' keys), so it is
    # intentionally not applied here.
    return p


if __name__ == "__main__":
    # small, lane-dense shapes: D and V multiples of 128, F = 4*D
    n_layer, n_embd, dim_ffn, vocab = 6, 128, 512, 256

    key = jax.random.PRNGKey(0)
    k_params, k_emb = jax.random.split(key)
    params = init_params(k_params, n_layer, n_embd, dim_ffn, vocab)
    emb_weight = jax.random.normal(k_emb, (vocab, n_embd), jnp.float32) * 0.1

    # ctx: only ctx[-1] is used by forward (single-token recurrent step).
    ctx = jnp.array([3, 7, 11, 42], dtype=jnp.int32)
    x_emb = emb_weight[ctx[-1]]                     # embedding gather (glue)

    # state == None branch: zeros, pp rows (index 4) initialized to -1e30.
    # Caller keeps state in (L, 5, D) layout so the in-place alias is copy-free.
    state = jnp.zeros((n_layer, 5, n_embd), jnp.float32).at[:, 4, :].set(-1e30)

    ref_logits, ref_state = ref_forward(params, x_emb,
                                        state.reshape(5 * n_layer, n_embd))

    prepped = prepare_params(params)                # one-time weight packing
    logits, new_state = ryoko_rnn_forward(prepped, x_emb, state)
    jax.block_until_ready((logits, new_state))

    assert jnp.allclose(logits, ref_logits, atol=2e-3, rtol=2e-3), "logits mismatch"
    assert jnp.allclose(new_state.reshape(5 * n_layer, n_embd), ref_state,
                        atol=2e-3, rtol=2e-3), "state mismatch"

    print("KERNEL_OK")
</pallas_src>

<mosaic_0001>
module attributes {stable_mosaic.version = 11 : i64} {
  func.func @rwkv_layer_kernel(%arg0: i32, %arg1: memref<1x128xf32, #tpu.memory_space<vmem>>, %arg2: memref<1x5x128xf32, #tpu.memory_space<vmem>>, %arg3: memref<1x128xf32, #tpu.memory_space<vmem>>, %arg4: memref<1x16x128xf32, #tpu.memory_space<vmem>>, %arg5: memref<1x128x384xbf16, #tpu.memory_space<vmem>>, %arg6: memref<1x128x128xbf16, #tpu.memory_space<vmem>>, %arg7: memref<1x128x640xbf16, #tpu.memory_space<vmem>>, %arg8: memref<1x512x128xbf16, #tpu.memory_space<vmem>>, %arg9: memref<1x128xf32, #tpu.memory_space<vmem>>, %arg10: memref<1x128xf32, #tpu.memory_space<vmem>>, %arg11: memref<1x5x128xf32, #tpu.memory_space<vmem>>, %arg12: memref<1x128xf32, #tpu.memory_space<vmem>>) attributes {dimension_semantics = [#tpu.dimension_semantics<arbitrary>], iteration_bounds = array<i64: 6>, scalar_prefetch = 0 : i64, scratch_operands = 1 : i64, tpu.core_type = #tpu.core_type<tc>, window_params = [{pipeline_mode = #tpu.pipeline_mode<synchronous>, transform_indices = @transform_0, window_bounds = array<i64: 1, 128>}, {transform_indices = @transform_1, window_bounds = array<i64: 1, 5, 128>}, {pipeline_mode = #tpu.pipeline_mode<synchronous>, transform_indices = @transform_2, window_bounds = array<i64: 1, 128>}, {transform_indices = @transform_3, window_bounds = array<i64: 1, 16, 128>}, {transform_indices = @transform_4, window_bounds = array<i64: 1, 128, 384>}, {transform_indices = @transform_5, window_bounds = array<i64: 1, 128, 128>}, {transform_indices = @transform_6, window_bounds = array<i64: 1, 128, 640>}, {transform_indices = @transform_7, window_bounds = array<i64: 1, 512, 128>}, {pipeline_mode = #tpu.pipeline_mode<synchronous>, transform_indices = @transform_8, window_bounds = array<i64: 1, 128>}, {pipeline_mode = #tpu.pipeline_mode<synchronous>, transform_indices = @transform_9, window_bounds = array<i64: 1, 128>}, {transform_indices = @transform_10, window_bounds = array<i64: 1, 5, 128>}]} {
    %c0_i32 = arith.constant 0 : i32
    %0 = arith.cmpi eq, %arg0, %c0_i32 : i32
    %1 = arith.extui %0 : i1 to i32
    %c0_i32_0 = arith.constant 0 : i32
    %2 = arith.cmpi ne, %1, %c0_i32_0 : i32
    scf.if %2 {
      %c0_81 = arith.constant 0 : index
      %c0_82 = arith.constant 0 : index
      %157 = vector.load %arg1[%c0_81, %c0_82] : memref<1x128xf32, #tpu.memory_space<vmem>>, vector<1x128xf32>
      %c0_83 = arith.constant 0 : index
      %c0_84 = arith.constant 0 : index
      %158 = vector.load %arg3[%c0_83, %c0_84] : memref<1x128xf32, #tpu.memory_space<vmem>>, vector<1x128xf32>
      %159 = arith.mulf %157, %157 : vector<1x128xf32>
      %cst_85 = arith.constant dense<0.000000e+00> : vector<1xf32>
      %160 = vector.multi_reduction <add>, %159, %cst_85 [1] : vector<1x128xf32> to vector<1xf32>
      %161 = vector.shape_cast %160 : vector<1xf32> to vector<1x1xf32>
      %cst_86 = arith.constant 1.280000e+02 : f32
      %162 = vector.broadcast %cst_86 : f32 to vector<1x1xf32>
      %163 = arith.divf %161, %162 : vector<1x1xf32>
      %cst_87 = arith.constant 9.99999974E-6 : f32
      %164 = vector.broadcast %cst_87 : f32 to vector<1x1xf32>
      %165 = arith.addf %163, %164 : vector<1x1xf32>
      %166 = math.rsqrt %165 : vector<1x1xf32>
      %167 = vector.broadcast %166 : vector<1x1xf32> to vector<1x128xf32>
      %168 = arith.mulf %157, %167 : vector<1x128xf32>
      %169 = arith.mulf %158, %168 : vector<1x128xf32>
      %c0_88 = arith.constant 0 : index
      %c0_89 = arith.constant 0 : index
      %170 = vector.load %arg12[%c0_88, %c0_89] : memref<1x128xf32, #tpu.memory_space<vmem>>, vector<1x128xf32>
      tpu.vector_store %arg12[%c0_88, %c0_89], %169 {strides = array<i32>} : memref<1x128xf32, #tpu.memory_space<vmem>>, vector<1x128xf32>,
    } else {
    }
    %c0 = arith.constant 0 : index
    %c0_1 = arith.constant 0 : index
    %3 = vector.load %arg12[%c0, %c0_1] : memref<1x128xf32, #tpu.memory_space<vmem>>, vector<1x128xf32>
    %c0_2 = arith.constant 0 : index
    %c0_3 = arith.constant 0 : index
    %c0_4 = arith.constant 0 : index
    %4 = vector.load %arg4[%c0_2, %c0_3, %c0_4] : memref<1x16x128xf32, #tpu.memory_space<vmem>>, vector<1x1x128xf32>
    %5 = vector.shape_cast %4 : vector<1x1x128xf32> to vector<1x128xf32>
    %6 = arith.mulf %3, %3 : vector<1x128xf32>
    %cst = arith.constant dense<0.000000e+00> : vector<1xf32>
    %7 = vector.multi_reduction <add>, %6, %cst [1] : vector<1x128xf32> to vector<1xf32>
    %8 = vector.shape_cast %7 : vector<1xf32> to vector<1x1xf32>
    %cst_5 = arith.constant 1.280000e+02 : f32
    %9 = vector.broadcast %cst_5 : f32 to vector<1x1xf32>
    %10 = arith.divf %8, %9 : vector<1x1xf32>
    %cst_6 = arith.constant 9.99999974E-6 : f32
    %11 = vector.broadcast %cst_6 : f32 to vector<1x1xf32>
    %12 = arith.addf %10, %11 : vector<1x1xf32>
    %13 = math.rsqrt %12 : vector<1x1xf32>
    %14 = vector.broadcast %13 : vector<1x1xf32> to vector<1x128xf32>
    %15 = arith.mulf %3, %14 : vector<1x128xf32>
    %16 = arith.mulf %5, %15 : vector<1x128xf32>
    %c0_7 = arith.constant 0 : index
    %c1 = arith.constant 1 : index
    %c0_8 = arith.constant 0 : index
    %17 = vector.load %arg2[%c0_7, %c1, %c0_8] : memref<1x5x128xf32, #tpu.memory_space<vmem>>, vector<1x1x128xf32>
    %18 = vector.shape_cast %17 : vector<1x1x128xf32> to vector<1x128xf32>
    %19 = arith.subf %16, %18 : vector<1x128xf32>
    %c0_9 = arith.constant 0 : index
    %c2 = arith.constant 2 : index
    %c0_10 = arith.constant 0 : index
    %20 = vector.load %arg4[%c0_9, %c2, %c0_10] : memref<1x16x128xf32, #tpu.memory_space<vmem>>, vector<1x3x128xf32>
    %21 = vector.shape_cast %20 : vector<1x3x128xf32> to vector<3x128xf32>
    %22 = vector.broadcast %19 : vector<1x128xf32> to vector<3x128xf32>
    %23 = arith.mulf %21, %22 : vector<3x128xf32>
    %24 = vector.broadcast %18 : vector<1x128xf32> to vector<3x128xf32>
    %25 = arith.addf %24, %23 : vector<3x128xf32>
    %26 = arith.truncf %25 : vector<3x128xf32> to vector<3x128xbf16>
    %c0_11 = arith.constant 0 : index
    %c0_12 = arith.constant 0 : index
    %c0_13 = arith.constant 0 : index
    %27 = vector.load %arg5[%c0_11, %c0_12, %c0_13] : memref<1x128x384xbf16, #tpu.memory_space<vmem>>, vector<1x128x384xbf16>
    %28 = vector.shape_cast %27 : vector<1x128x384xbf16> to vector<128x384xbf16>
    %cst_14 = arith.constant dense<0.000000e+00> : vector<3x384xf32>
    %29 = tpu.matmul %26, %28, %cst_14 {dimension_numbers = #tpu.dot_dimension_numbers<[1], [0], [0], [1], [0, 0, 1, 1], [], []>} : vector<3x128xbf16>, vector<128x384xbf16>, vector<3x384xf32> -> vector<3x384xf32>
    %30 = vector.extract_strided_slice %29 {offsets = [0, 0], sizes = [1, 128], strides = [1, 1]} : vector<3x384xf32> to vector<1x128xf32>
    %cst_15 = arith.constant 0.000000e+00 : f32
    %31 = vector.broadcast %cst_15 : f32 to vector<1x128xf32>
    %32 = arith.subf %31, %30 : vector<1x128xf32>
    %33 = math.exp %32 : vector<1x128xf32>
    %cst_16 = arith.constant 1.000000e+00 : f32
    %34 = vector.broadcast %cst_16 : f32 to vector<1x128xf32>
    %35 = arith.addf %34, %33 : vector<1x128xf32>
    %cst_17 = arith.constant 1.000000e+00 : f32
    %36 = vector.broadcast %cst_17 : f32 to vector<1x128xf32>
    %37 = arith.divf %36, %35 : vector<1x128xf32>
    %38 = vector.extract_strided_slice %29 {offsets = [1, 128], sizes = [1, 128], strides = [1, 1]} : vector<3x384xf32> to vector<1x128xf32>
    %39 = vector.extract_strided_slice %29 {offsets = [2, 256], sizes = [1, 128], strides = [1, 1]} : vector<3x384xf32> to vector<1x128xf32>
    %c0_18 = arith.constant 0 : index
    %c2_19 = arith.constant 2 : index
    %c0_20 = arith.constant 0 : index
    %40 = vector.load %arg2[%c0_18, %c2_19, %c0_20] : memref<1x5x128xf32, #tpu.memory_space<vmem>>, vector<1x1x128xf32>
    %41 = vector.shape_cast %40 : vector<1x1x128xf32> to vector<1x128xf32>
    %c0_21 = arith.constant 0 : index
    %c3 = arith.constant 3 : index
    %c0_22 = arith.constant 0 : index
    %42 = vector.load %arg2[%c0_21, %c3, %c0_22] : memref<1x5x128xf32, #tpu.memory_space<vmem>>, vector<1x1x128xf32>
    %43 = vector.shape_cast %42 : vector<1x1x128xf32> to vector<1x128xf32>
    %c0_23 = arith.constant 0 : index
    %c4 = arith.constant 4 : index
    %c0_24 = arith.constant 0 : index
    %44 = vector.load %arg2[%c0_23, %c4, %c0_24] : memref<1x5x128xf32, #tpu.memory_space<vmem>>, vector<1x1x128xf32>
    %45 = vector.shape_cast %44 : vector<1x1x128xf32> to vector<1x128xf32>
    %c0_25 = arith.constant 0 : index
    %c5 = arith.constant 5 : index
    %c0_26 = arith.constant 0 : index
    %46 = vector.load %arg4[%c0_25, %c5, %c0_26] : memref<1x16x128xf32, #tpu.memory_space<vmem>>, vector<1x1x128xf32>
    %47 = vector.shape_cast %46 : vector<1x1x128xf32> to vector<1x128xf32>
    %c0_27 = arith.constant 0 : index
    %c6 = arith.constant 6 : index
    %c0_28 = arith.constant 0 : index
    %48 = vector.load %arg4[%c0_27, %c6, %c0_28] : memref<1x16x128xf32, #tpu.memory_space<vmem>>, vector<1x1x128xf32>
    %49 = vector.shape_cast %48 : vector<1x1x128xf32> to vector<1x128xf32>
    %50 = arith.addf %47, %38 : vector<1x128xf32>
    %51 = arith.maximumf %45, %50 : vector<1x128xf32>
    %52 = arith.subf %45, %51 : vector<1x128xf32>
    %53 = math.exp %52 : vector<1x128xf32>
    %54 = arith.subf %50, %51 : vector<1x128xf32>
    %55 = math.exp %54 : vector<1x128xf32>
    %56 = arith.mulf %53, %41 : vector<1x128xf32>
    %57 = arith.mulf %55, %39 : vector<1x128xf32>
    %58 = arith.addf %56, %57 : vector<1x128xf32>
    %59 = arith.mulf %53, %43 : vector<1x128xf32>
    %60 = arith.addf %59, %55 : vector<1x128xf32>
    %61 = arith.addf %45, %49 : vector<1x128xf32>
    %62 = arith.maximumf %61, %38 : vector<1x128xf32>
    %63 = arith.subf %61, %62 : vector<1x128xf32>
    %64 = math.exp %63 : vector<1x128xf32>
    %65 = arith.subf %38, %62 : vector<1x128xf32>
    %66 = math.exp %65 : vector<1x128xf32>
    %67 = arith.mulf %64, %41 : vector<1x128xf32>
    %68 = arith.mulf %66, %39 : vector<1x128xf32>
    %69 = arith.addf %67, %68 : vector<1x128xf32>
    %70 = arith.mulf %64, %43 : vector<1x128xf32>
    %71 = arith.addf %70, %66 : vector<1x128xf32>
    %72 = tpu.reciprocal %60 : vector<1x128xf32> -> vector<1x128xf32>
    %73 = arith.mulf %58, %72 : vector<1x128xf32>
    %74 = arith.mulf %37, %73 : vector<1x128xf32>
    %75 = arith.truncf %74 : vector<1x128xf32> to vector<1x128xbf16>
    %c0_29 = arith.constant 0 : index
    %c0_30 = arith.constant 0 : index
    %c0_31 = arith.constant 0 : index
    %76 = vector.load %arg6[%c0_29, %c0_30, %c0_31] : memref<1x128x128xbf16, #tpu.memory_space<vmem>>, vector<1x128x128xbf16>
    %77 = vector.shape_cast %76 : vector<1x128x128xbf16> to vector<128x128xbf16>
    %cst_32 = arith.constant dense<0.000000e+00> : vector<1x128xf32>
    %78 = tpu.matmul %75, %77, %cst_32 {dimension_numbers = #tpu.dot_dimension_numbers<[1], [0], [0], [1], [0, 0, 1, 1], [], []>} : vector<1x128xbf16>, vector<128x128xbf16>, vector<1x128xf32> -> vector<1x128xf32>
    %79 = arith.addf %3, %78 : vector<1x128xf32>
    %c0_33 = arith.constant 0 : index
    %c1_34 = arith.constant 1 : index
    %c0_35 = arith.constant 0 : index
    %80 = vector.load %arg4[%c0_33, %c1_34, %c0_35] : memref<1x16x128xf32, #tpu.memory_space<vmem>>, vector<1x1x128xf32>
    %81 = vector.shape_cast %80 : vector<1x1x128xf32> to vector<1x128xf32>
    %82 = arith.mulf %79, %79 : vector<1x128xf32>
    %cst_36 = arith.constant dense<0.000000e+00> : vector<1xf32>
    %83 = vector.multi_reduction <add>, %82, %cst_36 [1] : vector<1x128xf32> to vector<1xf32>
    %84 = vector.shape_cast %83 : vector<1xf32> to vector<1x1xf32>
    %cst_37 = arith.constant 1.280000e+02 : f32
    %85 = vector.broadcast %cst_37 : f32 to vector<1x1xf32>
    %86 = arith.divf %84, %85 : vector<1x1xf32>
    %cst_38 = arith.constant 9.99999974E-6 : f32
    %87 = vector.broadcast %cst_38 : f32 to vector<1x1xf32>
    %88 = arith.addf %86, %87 : vector<1x1xf32>
    %89 = math.rsqrt %88 : vector<1x1xf32>
    %90 = vector.broadcast %89 : vector<1x1xf32> to vector<1x128xf32>
    %91 = arith.mulf %79, %90 : vector<1x128xf32>
    %92 = arith.mulf %81, %91 : vector<1x128xf32>
    %c0_39 = arith.constant 0 : index
    %c0_40 = arith.constant 0 : index
    %c0_41 = arith.constant 0 : index
    %93 = vector.load %arg2[%c0_39, %c0_40, %c0_41] : memref<1x5x128xf32, #tpu.memory_space<vmem>>, vector<1x1x128xf32>
    %94 = vector.shape_cast %93 : vector<1x1x128xf32> to vector<1x128xf32>
    %95 = arith.subf %92, %94 : vector<1x128xf32>
    %c0_42 = arith.constant 0 : index
    %c7 = arith.constant 7 : index
    %c0_43 = arith.constant 0 : index
    %96 = vector.load %arg4[%c0_42, %c7, %c0_43] : memref<1x16x128xf32, #tpu.memory_space<vmem>>, vector<1x2x128xf32>
    %97 = vector.shape_cast %96 : vector<1x2x128xf32> to vector<2x128xf32>
    %98 = vector.broadcast %95 : vector<1x128xf32> to vector<2x128xf32>
    %99 = arith.mulf %97, %98 : vector<2x128xf32>
    %100 = vector.broadcast %94 : vector<1x128xf32> to vector<2x128xf32>
    %101 = arith.addf %100, %99 : vector<2x128xf32>
    %102 = arith.truncf %101 : vector<2x128xf32> to vector<2x128xbf16>
    %c0_44 = arith.constant 0 : index
    %c0_45 = arith.constant 0 : index
    %c0_46 = arith.constant 0 : index
    %103 = vector.load %arg7[%c0_44, %c0_45, %c0_46] : memref<1x128x640xbf16, #tpu.memory_space<vmem>>, vector<1x128x640xbf16>
    %104 = vector.shape_cast %103 : vector<1x128x640xbf16> to vector<128x640xbf16>
    %cst_47 = arith.constant dense<0.000000e+00> : vector<2x640xf32>
    %105 = tpu.matmul %102, %104, %cst_47 {dimension_numbers = #tpu.dot_dimension_numbers<[1], [0], [0], [1], [0, 0, 1, 1], [], []>} : vector<2x128xbf16>, vector<128x640xbf16>, vector<2x640xf32> -> vector<2x640xf32>
    %106 = vector.extract_strided_slice %105 {offsets = [0, 0], sizes = [1, 128], strides = [1, 1]} : vector<2x640xf32> to vector<1x128xf32>
    %cst_48 = arith.constant 0.000000e+00 : f32
    %107 = vector.broadcast %cst_48 : f32 to vector<1x128xf32>
    %108 = arith.subf %107, %106 : vector<1x128xf32>
    %109 = math.exp %108 : vector<1x128xf32>
    %cst_49 = arith.constant 1.000000e+00 : f32
    %110 = vector.broadcast %cst_49 : f32 to vector<1x128xf32>
    %111 = arith.addf %110, %109 : vector<1x128xf32>
    %cst_50 = arith.constant 1.000000e+00 : f32
    %112 = vector.broadcast %cst_50 : f32 to vector<1x128xf32>
    %113 = arith.divf %112, %111 : vector<1x128xf32>
    %114 = vector.extract_strided_slice %105 {offsets = [1, 128], sizes = [1, 512], strides = [1, 1]} : vector<2x640xf32> to vector<1x512xf32>
    %cst_51 = arith.constant 0.000000e+00 : f32
    %115 = vector.broadcast %cst_51 : f32 to vector<1x512xf32>
    %116 = arith.maximumf %114, %115 : vector<1x512xf32>
    %117 = arith.mulf %116, %116 : vector<1x512xf32>
    %118 = arith.truncf %117 : vector<1x512xf32> to vector<1x512xbf16>
    %c0_52 = arith.constant 0 : index
    %c0_53 = arith.constant 0 : index
    %c0_54 = arith.constant 0 : index
    %119 = vector.load %arg8[%c0_52, %c0_53, %c0_54] : memref<1x512x128xbf16, #tpu.memory_space<vmem>>, vector<1x512x128xbf16>
    %120 = vector.shape_cast %119 : vector<1x512x128xbf16> to vector<512x128xbf16>
    %cst_55 = arith.constant dense<0.000000e+00> : vector<1x128xf32>
    %121 = tpu.matmul %118, %120, %cst_55 {dimension_numbers = #tpu.dot_dimension_numbers<[1], [0], [0], [1], [0, 0, 1, 1], [], []>} : vector<1x512xbf16>, vector<512x128xbf16>, vector<1x128xf32> -> vector<1x128xf32>
    %122 = arith.mulf %113, %121 : vector<1x128xf32>
    %123 = arith.addf %79, %122 : vector<1x128xf32>
    %c0_56 = arith.constant 0 : index
    %c0_57 = arith.constant 0 : index
    %c0_58 = arith.constant 0 : index
    %124 = vector.load %arg11[%c0_56, %c0_57, %c0_58] : memref<1x5x128xf32, #tpu.memory_space<vmem>>, vector<1x1x128xf32>
    %125 = vector.shape_cast %124 : vector<1x1x128xf32> to vector<1x128xf32>
    %126 = vector.shape_cast %92 : vector<1x128xf32> to vector<1x1x128xf32>
    tpu.vector_store %arg11[%c0_56, %c0_57, %c0_58], %126 {strides = array<i32>} : memref<1x5x128xf32, #tpu.memory_space<vmem>>, vector<1x1x128xf32>,
    %c0_59 = arith.constant 0 : index
    %c1_60 = arith.constant 1 : index
    %c0_61 = arith.constant 0 : index
    %127 = vector.load %arg11[%c0_59, %c1_60, %c0_61] : memref<1x5x128xf32, #tpu.memory_space<vmem>>, vector<1x1x128xf32>
    %128 = vector.shape_cast %127 : vector<1x1x128xf32> to vector<1x128xf32>
    %129 = vector.shape_cast %16 : vector<1x128xf32> to vector<1x1x128xf32>
    tpu.vector_store %arg11[%c0_59, %c1_60, %c0_61], %129 {strides = array<i32>} : memref<1x5x128xf32, #tpu.memory_space<vmem>>, vector<1x1x128xf32>,
    %c0_62 = arith.constant 0 : index
    %c2_63 = arith.constant 2 : index
    %c0_64 = arith.constant 0 : index
    %130 = vector.load %arg11[%c0_62, %c2_63, %c0_64] : memref<1x5x128xf32, #tpu.memory_space<vmem>>, vector<1x1x128xf32>
    %131 = vector.shape_cast %130 : vector<1x1x128xf32> to vector<1x128xf32>
    %132 = vector.shape_cast %69 : vector<1x128xf32> to vector<1x1x128xf32>
    tpu.vector_store %arg11[%c0_62, %c2_63, %c0_64], %132 {strides = array<i32>} : memref<1x5x128xf32, #tpu.memory_space<vmem>>, vector<1x1x128xf32>,
    %c0_65 = arith.constant 0 : index
    %c3_66 = arith.constant 3 : index
    %c0_67 = arith.constant 0 : index
    %133 = vector.load %arg11[%c0_65, %c3_66, %c0_67] : memref<1x5x128xf32, #tpu.memory_space<vmem>>, vector<1x1x128xf32>
    %134 = vector.shape_cast %133 : vector<1x1x128xf32> to vector<1x128xf32>
    %135 = vector.shape_cast %71 : vector<1x128xf32> to vector<1x1x128xf32>
    tpu.vector_store %arg11[%c0_65, %c3_66, %c0_67], %135 {strides = array<i32>} : memref<1x5x128xf32, #tpu.memory_space<vmem>>, vector<1x1x128xf32>,
    %c0_68 = arith.constant 0 : index
    %c4_69 = arith.constant 4 : index
    %c0_70 = arith.constant 0 : index
    %136 = vector.load %arg11[%c0_68, %c4_69, %c0_70] : memref<1x5x128xf32, #tpu.memory_space<vmem>>, vector<1x1x128xf32>
    %137 = vector.shape_cast %136 : vector<1x1x128xf32> to vector<1x128xf32>
    %138 = vector.shape_cast %62 : vector<1x128xf32> to vector<1x1x128xf32>
    tpu.vector_store %arg11[%c0_68, %c4_69, %c0_70], %138 {strides = array<i32>} : memref<1x5x128xf32, #tpu.memory_space<vmem>>, vector<1x1x128xf32>,
    %c0_71 = arith.constant 0 : index
    %c0_72 = arith.constant 0 : index
    %139 = vector.load %arg12[%c0_71, %c0_72] : memref<1x128xf32, #tpu.memory_space<vmem>>, vector<1x128xf32>
    tpu.vector_store %arg12[%c0_71, %c0_72], %123 {strides = array<i32>} : memref<1x128xf32, #tpu.memory_space<vmem>>, vector<1x128xf32>,
    %c1_i32 = arith.constant 1 : i32
    %140 = arith.addi %arg0, %c1_i32 : i32
    %c6_i32 = arith.constant 6 : i32
    %c0_i32_73 = arith.constant 0 : i32
    %141 = arith.cmpi eq, %c6_i32, %c0_i32_73 : i32
    %c1_i32_74 = arith.constant 1 : i32
    %142 = arith.select %141, %c1_i32_74, %c6_i32 : i32
    %143 = arith.remsi %140, %142 : i32
    %c0_i32_75 = arith.constant 0 : i32
    %144 = arith.cmpi ne, %143, %c0_i32_75 : i32
    %c0_i32_76 = arith.constant 0 : i32
    %145 = arith.cmpi slt, %143, %c0_i32_76 : i32
    %c0_i32_77 = arith.constant 0 : i32
    %146 = arith.cmpi slt, %142, %c0_i32_77 : i32
    %147 = arith.xori %145, %146 : i1
    %148 = arith.andi %147, %144 : i1
    %149 = arith.addi %143, %142 : i32
    %150 = arith.select %148, %149, %143 : i32
    %c0_i32_78 = arith.constant 0 : i32
    %151 = arith.cmpi eq, %150, %c0_i32_78 : i32
    %152 = arith.extui %151 : i1 to i32
    %c0_i32_79 = arith.constant 0 : i32
    %153 = arith.cmpi ne, %152, %c0_i32_79 : i32
    scf.if %153 {
      %cst_81 = arith.constant 5.000000e-01 : f32
      %157 = vector.broadcast %cst_81 : f32 to vector<1x128xf32>
      %158 = arith.mulf %123, %157 : vector<1x128xf32>
      %c0_82 = arith.constant 0 : index
      %c0_83 = arith.constant 0 : index
      %159 = vector.load %arg12[%c0_82, %c0_83] : memref<1x128xf32, #tpu.memory_space<vmem>>, vector<1x128xf32>
      tpu.vector_store %arg12[%c0_82, %c0_83], %158 {strides = array<i32>} : memref<1x128xf32, #tpu.memory_space<vmem>>, vector<1x128xf32>,
    } else {
    }
    %c5_i32 = arith.constant 5 : i32
    %154 = arith.cmpi eq, %arg0, %c5_i32 : i32
    %155 = arith.extui %154 : i1 to i32
    %c0_i32_80 = arith.constant 0 : i32
    %156 = arith.cmpi ne, %155, %c0_i32_80 : i32
    scf.if %156 {
      %c0_81 = arith.constant 0 : index
      %c0_82 = arith.constant 0 : index
      %157 = vector.load %arg12[%c0_81, %c0_82] : memref<1x128xf32, #tpu.memory_space<vmem>>, vector<1x128xf32>
      %c0_83 = arith.constant 0 : index
      %c0_84 = arith.constant 0 : index
      %158 = vector.load %arg9[%c0_83, %c0_84] : memref<1x128xf32, #tpu.memory_space<vmem>>, vector<1x128xf32>
      %159 = arith.mulf %157, %157 : vector<1x128xf32>
      %cst_85 = arith.constant dense<0.000000e+00> : vector<1xf32>
      %160 = vector.multi_reduction <add>, %159, %cst_85 [1] : vector<1x128xf32> to vector<1xf32>
      %161 = vector.shape_cast %160 : vector<1xf32> to vector<1x1xf32>
      %cst_86 = arith.constant 1.280000e+02 : f32
      %162 = vector.broadcast %cst_86 : f32 to vector<1x1xf32>
      %163 = arith.divf %161, %162 : vector<1x1xf32>
      %cst_87 = arith.constant 9.99999974E-6 : f32
      %164 = vector.broadcast %cst_87 : f32 to vector<1x1xf32>
      %165 = arith.addf %163, %164 : vector<1x1xf32>
      %166 = math.rsqrt %165 : vector<1x1xf32>
      %167 = vector.broadcast %166 : vector<1x1xf32> to vector<1x128xf32>
      %168 = arith.mulf %157, %167 : vector<1x128xf32>
      %169 = arith.mulf %158, %168 : vector<1x128xf32>
      %c0_88 = arith.constant 0 : index
      %c0_89 = arith.constant 0 : index
      %170 = vector.load %arg10[%c0_88, %c0_89] : memref<1x128xf32, #tpu.memory_space<vmem>>, vector<1x128xf32>
      tpu.vector_store %arg10[%c0_88, %c0_89], %169 {strides = array<i32>} : memref<1x128xf32, #tpu.memory_space<vmem>>, vector<1x128xf32>,
    } else {
    }
    return
  }
  func.func @transform_0(%arg0: i32) -> (i32, i32) {
    %c0_i32 = arith.constant 0 : i32
    %c0_i32_0 = arith.constant 0 : i32
    %c0_i32_1 = arith.constant 0 : i32
    return %c0_i32, %c0_i32_0 : i32, i32
  }
  func.func @transform_1(%arg0: i32) -> (i32, i32, i32) {
    %c0_i32 = arith.constant 0 : i32
    %c0_i32_0 = arith.constant 0 : i32
    %c0_i32_1 = arith.constant 0 : i32
    return %arg0, %c0_i32, %c0_i32_0 : i32, i32, i32
  }
  func.func @transform_2(%arg0: i32) -> (i32, i32) {
    %c0_i32 = arith.constant 0 : i32
    %c0_i32_0 = arith.constant 0 : i32
    %c0_i32_1 = arith.constant 0 : i32
    return %c0_i32, %c0_i32_0 : i32, i32
  }
  func.func @transform_3(%arg0: i32) -> (i32, i32, i32) {
    %c0_i32 = arith.constant 0 : i32
    %c0_i32_0 = arith.constant 0 : i32
    %c0_i32_1 = arith.constant 0 : i32
    return %arg0, %c0_i32, %c0_i32_0 : i32, i32, i32
  }
  func.func @transform_4(%arg0: i32) -> (i32, i32, i32) {
    %c0_i32 = arith.constant 0 : i32
    %c0_i32_0 = arith.constant 0 : i32
    %c0_i32_1 = arith.constant 0 : i32
    return %arg0, %c0_i32, %c0_i32_0 : i32, i32, i32
  }
  func.func @transform_5(%arg0: i32) -> (i32, i32, i32) {
    %c0_i32 = arith.constant 0 : i32
    %c0_i32_0 = arith.constant 0 : i32
    %c0_i32_1 = arith.constant 0 : i32
    return %arg0, %c0_i32, %c0_i32_0 : i32, i32, i32
  }
  func.func @transform_6(%arg0: i32) -> (i32, i32, i32) {
    %c0_i32 = arith.constant 0 : i32
    %c0_i32_0 = arith.constant 0 : i32
    %c0_i32_1 = arith.constant 0 : i32
    return %arg0, %c0_i32, %c0_i32_0 : i32, i32, i32
  }
  func.func @transform_7(%arg0: i32) -> (i32, i32, i32) {
    %c0_i32 = arith.constant 0 : i32
    %c0_i32_0 = arith.constant 0 : i32
    %c0_i32_1 = arith.constant 0 : i32
    return %arg0, %c0_i32, %c0_i32_0 : i32, i32, i32
  }
  func.func @transform_8(%arg0: i32) -> (i32, i32) {
    %c0_i32 = arith.constant 0 : i32
    %c0_i32_0 = arith.constant 0 : i32
    %c0_i32_1 = arith.constant 0 : i32
    return %c0_i32, %c0_i32_0 : i32, i32
  }
  func.func @transform_9(%arg0: i32) -> (i32, i32) {
    %c0_i32 = arith.constant 0 : i32
    %c0_i32_0 = arith.constant 0 : i32
    %c0_i32_1 = arith.constant 0 : i32
    return %c0_i32, %c0_i32_0 : i32, i32
  }
  func.func @transform_10(%arg0: i32) -> (i32, i32, i32) {
    %c0_i32 = arith.constant 0 : i32
    %c0_i32_0 = arith.constant 0 : i32
    %c0_i32_1 = arith.constant 0 : i32
    return %arg0, %c0_i32, %c0_i32_0 : i32, i32, i32
  }
}

</mosaic_0001>

<llo_original>
// kernel: tpu_custom_call.1
$region0: #{tpu_custom_call.1}
  #allocation0 [shape = 'u32[]', space=smem, size = 0x4, offset = 0x4, fixed_abs, tag = 'smem constant byte address 0x4 - core index']
  #allocation1 [shape = 'u32[144,128]{1,0:T(1,128)}', space=vmem, size = 0x12000, scoped, tag = 'internal scratch']
  #allocation2 [shape = 'f32[1,128]{1,0:T(1,128)}', space=vmem, size = 0x200, scoped, tag = 'scratch operand']
  %s0 = inlined_call_operand.vmem [shape: f32[1,128], index: 0, kind: input, shape index: {}]
  %s1 = inlined_call_operand.vmem [shape: f32[6,5,128], index: 1, kind: input, shape index: {}, may-alias: {1,10}]
  %s2 = inlined_call_operand.vmem [shape: f32[1,128], index: 2, kind: input, shape index: {}]
  %s3 = inlined_call_operand.vmem [shape: f32[6,16,128], index: 3, kind: input, shape index: {}]
  %s4 = inlined_call_operand.hbm [shape: bf16[6,128,384], index: 4, kind: input, shape index: {}]
  %s5 = inlined_call_operand.hbm [shape: bf16[6,128,128], index: 5, kind: input, shape index: {}]
  %s6 = inlined_call_operand.hbm [shape: bf16[6,128,640], index: 6, kind: input, shape index: {}]
  %s7 = inlined_call_operand.hbm [shape: bf16[6,512,128], index: 7, kind: input, shape index: {}]
  %s8 = inlined_call_operand.vmem [shape: f32[1,128], index: 8, kind: input, shape index: {}]
  %s9 = inlined_call_operand.hbm [shape: f32[1,128], index: 9, kind: output, shape index: {0}]
  %s10 = inlined_call_operand.vmem [shape: f32[6,5,128], index: 10, kind: output, shape index: {1}, may-alias: {1,10}]
  %11 = xla_tuple %s9, %s10
  %s12 = sld [smem:[#allocation0]]
  $region105: #{tpu_custom_call.1} parent=0
    _
  %s14 = ssub.s32 1, %s12
  %s15 = scalar_select 0, %s14, %s12
  $region1: #{tpu_custom_call.1} parent=0
    #allocation3 [shape = 'u8[196608]{0}', space=vmem, size = 0x30000, scoped, tag = 'input window, operand 4']
    #allocation4 [shape = 's32[2]{0}', space=sflag, size = 0x8, scoped, tag = 'scoped memory for tpu_custom_call.1']
    #allocation5 [shape = 's32[2]{0}', space=sflag, size = 0x8, scoped, tag = 'scoped memory for tpu_custom_call.1']
    #allocation6 [shape = 'u8[65536]{0}', space=vmem, size = 0x10000, scoped, tag = 'input window, operand 5']
    #allocation7 [shape = 's32[2]{0}', space=sflag, size = 0x8, scoped, tag = 'scoped memory for tpu_custom_call.1']
    #allocation8 [shape = 'u8[327680]{0}', space=vmem, size = 0x50000, scoped, tag = 'input window, operand 6']
    #allocation9 [shape = 'u8[262144]{0}', space=vmem, size = 0x40000, scoped, tag = 'input window, operand 7']
    #allocation10 [shape = 's32[2]{0}', space=sflag, size = 0x8, scoped, tag = 'scoped memory for tpu_custom_call.1']
    #allocation11 [shape = 'u8[512]{0}', space=vmem, size = 0x400, scoped, tag = 'output window, operand 0, single buffered']
    %16 = vsyncpa [#allocation4], 0
    %s17 = scalar_lea.sflag [#allocation4], 1
    %18 = vsyncpa %s17, 0
    %19 = vsyncpa [#allocation7], 0
    %s20 = scalar_lea.sflag [#allocation7], 1
    %21 = vsyncpa %s20, 0
    %22 = vsyncpa [#allocation10], 0
    %s23 = scalar_lea.sflag [#allocation10], 1
    %24 = vsyncpa %s23, 0
    %25 = vsyncpa [#allocation5], 0
    loop: start=0, step=1, limit=8
    $region2: #{tpu_custom_call.1} parent=1 // loop_pre_header
      _
    $region3: #{tpu_custom_call.1} parent=1 // loop_header
      %s27 = sphi 0, %s31
      %p28 = scmp.ge.s32.totalorder %s27, 8
      %s35 = sphi 0, %s35
      %s37 = sphi 0, %s35
      %s38 = sphi 0, %s37
      %s52 = sphi 0, %s38
      %s58 = sphi 0, %s60
      %s61 = sphi 0, %s58
      %s62 = sphi 0, %s61
      %s78 = sphi 0, %s62
      %s82 = sphi 0, %s82
      %s84 = sphi 0, %s82
      %s85 = sphi 0, %s84
      %s99 = sphi 0, %s85
      %s105 = sphi 0, %s107
      %s108 = sphi 0, %s105
      %s109 = sphi 0, %s108
      %s125 = sphi 0, %s109
      %s131 = sphi 0, %s133
      %s134 = sphi 0, %s131
      %s135 = sphi 0, %s134
      %s151 = sphi 0, %s135
      %s157 = sphi 0, %s159
      %s160 = sphi 0, %s157
      %s161 = sphi 0, %s160
      %s177 = sphi 0, %s161
      %s183 = sphi 0, %s185
      %s186 = sphi 0, %s183
      %s187 = sphi 0, %s186
      %s203 = sphi 0, %s187
      %s209 = sphi 0, %s211
      %s212 = sphi 0, %s209
      %s213 = sphi 0, %s212
      %s229 = sphi 0, %s213
      %s233 = sphi 0, %s233
      %s235 = sphi 0, %s233
      %s236 = sphi 0, %s235
      %s250 = sphi 0, %s236
      %s254 = sphi 0, %s254
      %s256 = sphi 0, %s254
      %s257 = sphi 0, %s256
      %s271 = sphi 0, %s257
      %s277 = sphi 0, %s279
      %s280 = sphi 0, %s277
      %s281 = sphi 0, %s280
      %s297 = sphi 0, %s281
    $region4: #{tpu_custom_call.1} parent=1 // loop_header_branch
      %30 = sbr.rel (%p28) target = $region8
    $region5: #{tpu_custom_call.1} parent=1 // loop_body
      %s32 = ssub.s32 %s27, 1
      %s33 = ssub.s32 %s27, 2
      %s34 = sadd.s32 %s27, 1
      %s36 = sadd.s32 %s35, 1
      %p39 = scmp.eq.s32.totalorder %s27, 5
      %p40 = scmp.ne.s32.totalorder %s35, %s37
      %p41 = scmp.eq.s32.totalorder %s27, 0
      %p42 = por %p40, %p41
      %p43 = scmp.ne.s32.totalorder %s35, %s37
      %p44 = scmp.eq.s32.totalorder %s32, 5
      %p45 = por %p43, %p44
      %p46 = scmp.ne.s32.totalorder %s37, %s38
      %p47 = scmp.eq.s32.totalorder %s32, 0
      %p48 = por %p46, %p47
      %p49 = scmp.ne.s32.totalorder %s37, %s38
      %p50 = scmp.eq.s32.totalorder %s33, 5
      %p51 = por %p49, %p50
      %p53 = scmp.ne.s32.totalorder %s38, %s52
      %p54 = scmp.eq.s32.totalorder %s33, 0
      %p55 = por %p53, %p54
      %s56 = ssub.s32 %s27, %s34
      %p57 = scmp.eq.s32.totalorder %s56, 0
      %s59 = sadd.s32 %s58, 1
      %s60 = scalar_select %p57, %s58, %s59
      %p63 = pneg %p57
      %p64 = scmp.eq.s32.totalorder %s27, 5
      %p65 = por %p63, %p64
      %p66 = scmp.ne.s32.totalorder %s58, %s61
      %p67 = scmp.eq.s32.totalorder %s27, 0
      %p68 = por %p66, %p67
      %p69 = scmp.ne.s32.totalorder %s58, %s61
      %p70 = scmp.eq.s32.totalorder %s32, 5
      %p71 = por %p69, %p70
      %p72 = scmp.ne.s32.totalorder %s61, %s62
      %p73 = scmp.eq.s32.totalorder %s32, 0
      %p74 = por %p72, %p73
      %p75 = scmp.ne.s32.totalorder %s61, %s62
      %p76 = scmp.eq.s32.totalorder %s33, 5
      %p77 = por %p75, %p76
      %p79 = scmp.ne.s32.totalorder %s62, %s78
      %p80 = scmp.eq.s32.totalorder %s33, 0
      %p81 = por %p79, %p80
      %s83 = sadd.s32 %s82, 1
      %p86 = scmp.eq.s32.totalorder %s27, 5
      %p87 = scmp.ne.s32.totalorder %s82, %s84
      %p88 = scmp.eq.s32.totalorder %s27, 0
      %p89 = por %p87, %p88
      %p90 = scmp.ne.s32.totalorder %s82, %s84
      %p91 = scmp.eq.s32.totalorder %s32, 5
      %p92 = por %p90, %p91
      %p93 = scmp.ne.s32.totalorder %s84, %s85
      %p94 = scmp.eq.s32.totalorder %s32, 0
      %p95 = por %p93, %p94
      %p96 = scmp.ne.s32.totalorder %s84, %s85
      %p97 = scmp.eq.s32.totalorder %s33, 5
      %p98 = por %p96, %p97
      %p100 = scmp.ne.s32.totalorder %s85, %s99
      %p101 = scmp.eq.s32.totalorder %s33, 0
      %p102 = por %p100, %p101
      %s103 = ssub.s32 %s27, %s34
      %p104 = scmp.eq.s32.totalorder %s103, 0
      %s106 = sadd.s32 %s105, 1
      %s107 = scalar_select %p104, %s105, %s106
      %p110 = pneg %p104
      %p111 = scmp.eq.s32.totalorder %s27, 5
      %p112 = por %p110, %p111
      %p113 = scmp.ne.s32.totalorder %s105, %s108
      %p114 = scmp.eq.s32.totalorder %s27, 0
      %p115 = por %p113, %p114
      %p116 = scmp.ne.s32.totalorder %s105, %s108
      %p117 = scmp.eq.s32.totalorder %s32, 5
      %p118 = por %p116, %p117
      %p119 = scmp.ne.s32.totalorder %s108, %s109
      %p120 = scmp.eq.s32.totalorder %s32, 0
      %p121 = por %p119, %p120
      %p122 = scmp.ne.s32.totalorder %s108, %s109
      %p123 = scmp.eq.s32.totalorder %s33, 5
      %p124 = por %p122, %p123
      %p126 = scmp.ne.s32.totalorder %s109, %s125
      %p127 = scmp.eq.s32.totalorder %s33, 0
      %p128 = por %p126, %p127
      %s129 = ssub.s32 %s27, %s34
      %p130 = scmp.eq.s32.totalorder %s129, 0
      %s132 = sadd.s32 %s131, 1
      %s133 = scalar_select %p130, %s131, %s132
      %p136 = pneg %p130
      %p137 = scmp.eq.s32.totalorder %s27, 5
      %p138 = por %p136, %p137
      %p139 = scmp.ne.s32.totalorder %s131, %s134
      %p140 = scmp.eq.s32.totalorder %s27, 0
      %p141 = por %p139, %p140
      %p142 = scmp.ne.s32.totalorder %s131, %s134
      %p143 = scmp.eq.s32.totalorder %s32, 5
      %p144 = por %p142, %p143
      %p145 = scmp.ne.s32.totalorder %s134, %s135
      %p146 = scmp.eq.s32.totalorder %s32, 0
      %p147 = por %p145, %p146
      %p148 = scmp.ne.s32.totalorder %s134, %s135
      %p149 = scmp.eq.s32.totalorder %s33, 5
      %p150 = por %p148, %p149
      %p152 = scmp.ne.s32.totalorder %s135, %s151
      %p153 = scmp.eq.s32.totalorder %s33, 0
      %p154 = por %p152, %p153
      %s155 = ssub.s32 %s27, %s34
      %p156 = scmp.eq.s32.totalorder %s155, 0
      %s158 = sadd.s32 %s157, 1
      %s159 = scalar_select %p156, %s157, %s158
      %p162 = pneg %p156
      %p163 = scmp.eq.s32.totalorder %s27, 5
      %p164 = por %p162, %p163
      %p165 = scmp.ne.s32.totalorder %s157, %s160
      %p166 = scmp.eq.s32.totalorder %s27, 0
      %p167 = por %p165, %p166
      %p168 = scmp.ne.s32.totalorder %s157, %s160
      %p169 = scmp.eq.s32.totalorder %s32, 5
      %p170 = por %p168, %p169
      %p171 = scmp.ne.s32.totalorder %s160, %s161
      %p172 = scmp.eq.s32.totalorder %s32, 0
      %p173 = por %p171, %p172
      %p174 = scmp.ne.s32.totalorder %s160, %s161
      %p175 = scmp.eq.s32.totalorder %s33, 5
      %p176 = por %p174, %p175
      %p178 = scmp.ne.s32.totalorder %s161, %s177
      %p179 = scmp.eq.s32.totalorder %s33, 0
      %p180 = por %p178, %p179
      %s181 = ssub.s32 %s27, %s34
      %p182 = scmp.eq.s32.totalorder %s181, 0
      %s184 = sadd.s32 %s183, 1
      %s185 = scalar_select %p182, %s183, %s184
      %p188 = pneg %p182
      %p189 = scmp.eq.s32.totalorder %s27, 5
      %p190 = por %p188, %p189
      %p191 = scmp.ne.s32.totalorder %s183, %s186
      %p192 = scmp.eq.s32.totalorder %s27, 0
      %p193 = por %p191, %p192
      %p194 = scmp.ne.s32.totalorder %s183, %s186
      %p195 = scmp.eq.s32.totalorder %s32, 5
      %p196 = por %p194, %p195
      %p197 = scmp.ne.s32.totalorder %s186, %s187
      %p198 = scmp.eq.s32.totalorder %s32, 0
      %p199 = por %p197, %p198
      %p200 = scmp.ne.s32.totalorder %s186, %s187
      %p201 = scmp.eq.s32.totalorder %s33, 5
      %p202 = por %p200, %p201
      %p204 = scmp.ne.s32.totalorder %s187, %s203
      %p205 = scmp.eq.s32.totalorder %s33, 0
      %p206 = por %p204, %p205
      %s207 = ssub.s32 %s27, %s34
      %p208 = scmp.eq.s32.totalorder %s207, 0
      %s210 = sadd.s32 %s209, 1
      %s211 = scalar_select %p208, %s209, %s210
      %p214 = pneg %p208
      %p215 = scmp.eq.s32.totalorder %s27, 5
      %p216 = por %p214, %p215
      %p217 = scmp.ne.s32.totalorder %s209, %s212
      %p218 = scmp.eq.s32.totalorder %s27, 0
      %p219 = por %p217, %p218
      %p220 = scmp.ne.s32.totalorder %s209, %s212
      %p221 = scmp.eq.s32.totalorder %s32, 5
      %p222 = por %p220, %p221
      %p223 = scmp.ne.s32.totalorder %s212, %s213
      %p224 = scmp.eq.s32.totalorder %s32, 0
      %p225 = por %p223, %p224
      %p226 = scmp.ne.s32.totalorder %s212, %s213
      %p227 = scmp.eq.s32.totalorder %s33, 5
      %p228 = por %p226, %p227
      %p230 = scmp.ne.s32.totalorder %s213, %s229
      %p231 = scmp.eq.s32.totalorder %s33, 0
      %p232 = por %p230, %p231
      %s234 = sadd.s32 %s233, 1
      %p237 = scmp.eq.s32.totalorder %s27, 5
      %p238 = scmp.ne.s32.totalorder %s233, %s235
      %p239 = scmp.eq.s32.totalorder %s27, 0
      %p240 = por %p238, %p239
      %p241 = scmp.ne.s32.totalorder %s233, %s235
      %p242 = scmp.eq.s32.totalorder %s32, 5
      %p243 = por %p241, %p242
      %p244 = scmp.ne.s32.totalorder %s235, %s236
      %p245 = scmp.eq.s32.totalorder %s32, 0
      %p246 = por %p244, %p245
      %p247 = scmp.ne.s32.totalorder %s235, %s236
      %p248 = scmp.eq.s32.totalorder %s33, 5
      %p249 = por %p247, %p248
      %p251 = scmp.ne.s32.totalorder %s236, %s250
      %p252 = scmp.eq.s32.totalorder %s33, 0
      %p253 = por %p251, %p252
      %s255 = sadd.s32 %s254, 1
      %p258 = scmp.eq.s32.totalorder %s27, 5
      %p259 = scmp.ne.s32.totalorder %s254, %s256
      %p260 = scmp.eq.s32.totalorder %s27, 0
      %p261 = por %p259, %p260
      %p262 = scmp.ne.s32.totalorder %s254, %s256
      %p263 = scmp.eq.s32.totalorder %s32, 5
      %p264 = por %p262, %p263
      %p265 = scmp.ne.s32.totalorder %s256, %s257
      %p266 = scmp.eq.s32.totalorder %s32, 0
      %p267 = por %p265, %p266
      %p268 = scmp.ne.s32.totalorder %s256, %s257
      %p269 = scmp.eq.s32.totalorder %s33, 5
      %p270 = por %p268, %p269
      %p272 = scmp.ne.s32.totalorder %s257, %s271
      %p273 = scmp.eq.s32.totalorder %s33, 0
      %p274 = por %p272, %p273
      %s275 = ssub.s32 %s27, %s34
      %p276 = scmp.eq.s32.totalorder %s275, 0
      %s278 = sadd.s32 %s277, 1
      %s279 = scalar_select %p276, %s277, %s278
      %p282 = pneg %p276
      %p283 = scmp.eq.s32.totalorder %s27, 5
      %p284 = por %p282, %p283
      %p285 = scmp.ne.s32.totalorder %s277, %s280
      %p286 = scmp.eq.s32.totalorder %s27, 0
      %p287 = por %p285, %p286
      %p288 = scmp.ne.s32.totalorder %s277, %s280
      %p289 = scmp.eq.s32.totalorder %s32, 5
      %p290 = por %p288, %p289
      %p291 = scmp.ne.s32.totalorder %s280, %s281
      %p292 = scmp.eq.s32.totalorder %s32, 0
      %p293 = por %p291, %p292
      %p294 = scmp.ne.s32.totalorder %s280, %s281
      %p295 = scmp.eq.s32.totalorder %s33, 5
      %p296 = por %p294, %p295
      %p298 = scmp.ne.s32.totalorder %s281, %s297
      %p299 = scmp.eq.s32.totalorder %s33, 0
      %p300 = por %p298, %p299
      %p301 = scmp.le.s32.totalorder 1, %s27
      %p302 = scmp.lt.s32.totalorder %s27, 7
      %p303 = pnand %p301, %p302
      %p304 = pneg %p303
      // Predicated region
      $region9: #{tpu_custom_call.1} parent=5 // pred_check
        _
      $region10: #{tpu_custom_call.1} parent=5 // pred_check_branch
        %306 = sbr.rel (%p303) target = $region12
      $region11: #{tpu_custom_call.1} parent=5 // pred_region
        %s307 = ssub.s32 %s27, 1
        // Predicated region
        $region13: #{tpu_custom_call.1} parent=11 // pred_check
          %p308 = pneg %p48
        $region14: #{tpu_custom_call.1} parent=11 // pred_check_branch
          %310 = sbr.rel (%p308) target = $region16
        $region15: #{tpu_custom_call.1} parent=11 // pred_region
          _
        $region16: #{tpu_custom_call.1} parent=11 // pred_fallthru
          _
        // Predicated region
        $region17: #{tpu_custom_call.1} parent=11 // pred_check
          %p311 = pneg %p95
        $region18: #{tpu_custom_call.1} parent=11 // pred_check_branch
          %313 = sbr.rel (%p311) target = $region20
        $region19: #{tpu_custom_call.1} parent=11 // pred_region
          _
        $region20: #{tpu_custom_call.1} parent=11 // pred_fallthru
          _
        // Predicated region
        $region21: #{tpu_custom_call.1} parent=11 // pred_check
          %p314 = pneg %p246
        $region22: #{tpu_custom_call.1} parent=11 // pred_check_branch
          %316 = sbr.rel (%p314) target = $region24
        $region23: #{tpu_custom_call.1} parent=11 // pred_region
          _
        $region24: #{tpu_custom_call.1} parent=11 // pred_fallthru
          _
      $region12: #{tpu_custom_call.1} parent=5 // pred_fallthru
        _
      %p317 = scmp.lt.s32.totalorder %s27, 6
      // Predicated region
      $region25: #{tpu_custom_call.1} parent=5 // pred_check
        %p318 = pneg %p317
      $region26: #{tpu_custom_call.1} parent=5 // pred_check_branch
        %320 = sbr.rel (%p318) target = $region28
      $region27: #{tpu_custom_call.1} parent=5 // pred_region
        // Predicated region
        $region29: #{tpu_custom_call.1} parent=27 // pred_check
          %p321 = pneg %p68
        $region30: #{tpu_custom_call.1} parent=27 // pred_check_branch
          %323 = sbr.rel (%p321) target = $region32
        $region31: #{tpu_custom_call.1} parent=27 // pred_region
          %p324 = scmp.lt.s32.totalorder %s27, 5
          %s325 = scalar_select %p324, %s27, 5
          %s326 = smul.addr %s325, 8
          %s327 = scalar_lea.vmem %s1, %s326
        $region32: #{tpu_custom_call.1} parent=27 // pred_fallthru
          _
        // Predicated region
        $region33: #{tpu_custom_call.1} parent=27 // pred_check
          %p328 = pneg %p115
        $region34: #{tpu_custom_call.1} parent=27 // pred_check_branch
          %330 = sbr.rel (%p328) target = $region36
        $region35: #{tpu_custom_call.1} parent=27 // pred_region
          %p331 = scmp.lt.s32.totalorder %s27, 5
          %s332 = scalar_select %p331, %s27, 5
          %s333 = smul.addr %s332, 2
          %s334 = smul.addr %s333, 8
          %s335 = scalar_lea.vmem %s3, %s334
        $region36: #{tpu_custom_call.1} parent=27 // pred_fallthru
          _
        // Predicated region
        $region37: #{tpu_custom_call.1} parent=27 // pred_check
          %p336 = pneg %p141
        $region38: #{tpu_custom_call.1} parent=27 // pred_check_branch
          %338 = sbr.rel (%p336) target = $region40
        $region39: #{tpu_custom_call.1} parent=27 // pred_region
          %s339 = sand.u32 %s131, 1
          %s340 = scalar_lea.sflag [#allocation4], %s339
          %s341 = sand.u32 %s131, 1
          %s342 = smul.addr %s341, 192
          %s343 = scalar_lea.vmem [#allocation3], %s342
          %s345 = ssub.s32 3072, 3072
          %346 = vsyncadd %s340, %s345
          %s347 = smul.addr %s27, 48
          %s348 = smul.addr %s347, 64
          %s349 = scalar_lea.hbm %s4, %s348
          %s350 = sshll.u32 %s343, 4
          %s351 = int_to_ptr.vmem [resolvable:$true] %s350
          %356 = dma.hbm_to_vmem [thread:$0]  %s349, 3072, %s351, %s340, 192, 192, 12
        $region40: #{tpu_custom_call.1} parent=27 // pred_fallthru
          _
        // Predicated region
        $region41: #{tpu_custom_call.1} parent=27 // pred_check
          %p357 = pneg %p167
        $region42: #{tpu_custom_call.1} parent=27 // pred_check_branch
          %359 = sbr.rel (%p357) target = $region44
        $region43: #{tpu_custom_call.1} parent=27 // pred_region
          %s360 = sand.u32 %s27, 1
          %s361 = scalar_lea.sflag [#allocation7], %s360
          %s362 = sand.u32 %s157, 1
          %s363 = smul.addr %s362, 64
          %s364 = scalar_lea.vmem [#allocation6], %s363
          %s366 = ssub.s32 1024, 1024
          %367 = vsyncadd %s361, %s366
          %s368 = smul.addr %s27, 16
          %s369 = smul.addr %s368, 64
          %s370 = scalar_lea.hbm %s5, %s369
          %s371 = sshll.u32 %s364, 4
          %s372 = int_to_ptr.vmem [resolvable:$true] %s371
          %377 = dma.hbm_to_vmem [thread:$0]  %s370, 1024, %s372, %s361, 64, 64, 4
        $region44: #{tpu_custom_call.1} parent=27 // pred_fallthru
          _
        // Predicated region
        $region45: #{tpu_custom_call.1} parent=27 // pred_check
          %p378 = pneg %p193
        $region46: #{tpu_custom_call.1} parent=27 // pred_check_branch
          %380 = sbr.rel (%p378) target = $region48
        $region47: #{tpu_custom_call.1} parent=27 // pred_region
          %s381 = sand.u32 %s27, 1
          %s382 = scalar_lea.sflag [#allocation7], %s381
          %s383 = sand.u32 %s183, 1
          %s384 = smul.addr %s383, 320
          %s385 = scalar_lea.vmem [#allocation8], %s384
          %s387 = ssub.s32 5120, 5120
          %388 = vsyncadd %s382, %s387
          %s389 = smul.addr %s27, 80
          %s390 = smul.addr %s389, 64
          %s391 = scalar_lea.hbm %s6, %s390
          %s392 = sshll.u32 %s385, 4
          %s393 = int_to_ptr.vmem [resolvable:$true] %s392
          %398 = dma.hbm_to_vmem [thread:$0]  %s391, 5120, %s393, %s382, 320, 320, 20
        $region48: #{tpu_custom_call.1} parent=27 // pred_fallthru
          _
        // Predicated region
        $region49: #{tpu_custom_call.1} parent=27 // pred_check
          %p399 = pneg %p219
        $region50: #{tpu_custom_call.1} parent=27 // pred_check_branch
          %401 = sbr.rel (%p399) target = $region52
        $region51: #{tpu_custom_call.1} parent=27 // pred_region
          %s402 = sand.u32 %s209, 1
          %s403 = scalar_lea.sflag [#allocation10], %s402
          %s404 = sand.u32 %s209, 1
          %s405 = smul.addr %s404, 256
          %s406 = scalar_lea.vmem [#allocation9], %s405
          %s408 = ssub.s32 4096, 4096
          %409 = vsyncadd %s403, %s408
          %s410 = smul.addr %s27, 64
          %s411 = smul.addr %s410, 64
          %s412 = scalar_lea.hbm %s7, %s411
          %s413 = sshll.u32 %s406, 4
          %s414 = int_to_ptr.vmem [resolvable:$true] %s413
          %419 = dma.hbm_to_vmem [thread:$0]  %s412, 4096, %s414, %s403, 64, 64, 4
        $region52: #{tpu_custom_call.1} parent=27 // pred_fallthru
          _
      $region28: #{tpu_custom_call.1} parent=5 // pred_fallthru
        _
      %p420 = scmp.le.s32.totalorder 1, %s27
      %p421 = scmp.lt.s32.totalorder %s27, 7
      %p422 = pnand %p420, %p421
      %p423 = pneg %p422
      // Predicated region
      $region53: #{tpu_custom_call.1} parent=5 // pred_check
        _
      $region54: #{tpu_custom_call.1} parent=5 // pred_check_branch
        %425 = sbr.rel (%p422) target = $region56
      $region55: #{tpu_custom_call.1} parent=5 // pred_region
        %s426 = ssub.s32 %s27, 1
        %s427 = sand.u32 %s134, 1
        %s428 = scalar_lea.sflag [#allocation4], %s427
        %s429 = sand.u32 %s134, 1
        %s430 = smul.addr %s429, 192
        %s431 = scalar_lea.vmem [#allocation3], %s430
        // Predicated region
        $region57: #{tpu_custom_call.1} parent=55 // pred_check
          %p432 = pneg %p147
        $region58: #{tpu_custom_call.1} parent=55 // pred_check_branch
          %434 = sbr.rel (%p432) target = $region60
        $region59: #{tpu_custom_call.1} parent=55 // pred_region
          %435 = dma.done %s428, 3072
        $region60: #{tpu_custom_call.1} parent=55 // pred_fallthru
          _
        %s436 = sand.u32 %s32, 1
        %s437 = scalar_lea.sflag [#allocation7], %s436
        %s438 = sand.u32 %s160, 1
        %s439 = smul.addr %s438, 64
        %s440 = scalar_lea.vmem [#allocation6], %s439
        // Predicated region
        $region61: #{tpu_custom_call.1} parent=55 // pred_check
          %p441 = pneg %p173
        $region62: #{tpu_custom_call.1} parent=55 // pred_check_branch
          %443 = sbr.rel (%p441) target = $region64
        $region63: #{tpu_custom_call.1} parent=55 // pred_region
          %444 = dma.done %s437, 1024
        $region64: #{tpu_custom_call.1} parent=55 // pred_fallthru
          _
        %s445 = sand.u32 %s32, 1
        %s446 = scalar_lea.sflag [#allocation7], %s445
        %s447 = sand.u32 %s186, 1
        %s448 = smul.addr %s447, 320
        %s449 = scalar_lea.vmem [#allocation8], %s448
        // Predicated region
        $region65: #{tpu_custom_call.1} parent=55 // pred_check
          %p450 = pneg %p199
        $region66: #{tpu_custom_call.1} parent=55 // pred_check_branch
          %452 = sbr.rel (%p450) target = $region68
        $region67: #{tpu_custom_call.1} parent=55 // pred_region
          %453 = dma.done %s446, 5120
        $region68: #{tpu_custom_call.1} parent=55 // pred_fallthru
          _
        %s454 = sand.u32 %s212, 1
        %s455 = scalar_lea.sflag [#allocation10], %s454
        %s456 = sand.u32 %s212, 1
        %s457 = smul.addr %s456, 256
        %s458 = scalar_lea.vmem [#allocation9], %s457
        // Predicated region
        $region69: #{tpu_custom_call.1} parent=55 // pred_check
          %p459 = pneg %p225
        $region70: #{tpu_custom_call.1} parent=55 // pred_check_branch
          %461 = sbr.rel (%p459) target = $region72
        $region71: #{tpu_custom_call.1} parent=55 // pred_region
          %462 = dma.done %s455, 4096
        $region72: #{tpu_custom_call.1} parent=55 // pred_fallthru
          _
        %p463 = pneg %p48
        %p464 = pneg %p45
        %p465 = scmp.lt.s32.totalorder %s32, 5
        %s466 = scalar_select %p465, %s32, 5
        %s467 = smul.addr %s466, 8
        %s468 = scalar_lea.vmem %s1, %s467
        %p469 = pneg %p74
        %p470 = pneg %p71
        %p471 = pneg %p95
        %p472 = pneg %p92
        %p473 = scmp.lt.s32.totalorder %s32, 5
        %s474 = scalar_select %p473, %s32, 5
        %s475 = smul.addr %s474, 2
        %s476 = smul.addr %s475, 8
        %s477 = scalar_lea.vmem %s3, %s476
        %p478 = pneg %p121
        %p479 = pneg %p118
        %s480 = sand.u32 %s134, 1
        %s481 = scalar_lea.sflag [#allocation4], %s480
        %s482 = sand.u32 %s134, 1
        %s483 = smul.addr %s482, 192
        %s484 = scalar_lea.vmem [#allocation3], %s483
        %p485 = pneg %p147
        %p486 = pneg %p144
        %s487 = sand.u32 %s32, 1
        %s488 = scalar_lea.sflag [#allocation7], %s487
        %s489 = sand.u32 %s160, 1
        %s490 = smul.addr %s489, 64
        %s491 = scalar_lea.vmem [#allocation6], %s490
        %p492 = pneg %p173
        %p493 = pneg %p170
        %s494 = sand.u32 %s32, 1
        %s495 = scalar_lea.sflag [#allocation7], %s494
        %s496 = sand.u32 %s186, 1
        %s497 = smul.addr %s496, 320
        %s498 = scalar_lea.vmem [#allocation8], %s497
        %p499 = pneg %p199
        %p500 = pneg %p196
        %s501 = sand.u32 %s212, 1
        %s502 = scalar_lea.sflag [#allocation10], %s501
        %s503 = sand.u32 %s212, 1
        %s504 = smul.addr %s503, 256
        %s505 = scalar_lea.vmem [#allocation9], %s504
        %p506 = pneg %p225
        %p507 = pneg %p222
        %p508 = pneg %p246
        %p509 = pneg %p243
        %p510 = pneg %p267
        %p511 = pneg %p264
        %p512 = pneg %p293
        %p513 = pneg %p290
        %p514 = scmp.lt.s32.totalorder %s32, 5
        %s515 = scalar_select %p514, %s32, 5
        %s516 = smul.addr %s515, 8
        %s517 = scalar_lea.vmem %s10, %s516
        %p518 = scmp.lt.s32.totalorder %s32, 5
        %s519 = scalar_select %p518, %s32, 5
        %s520 = smul.addr %s519, 8
        %s521 = scalar_lea.vmem %s1, %s520
        %p522 = scmp.lt.s32.totalorder %s32, 5
        %s523 = scalar_select %p522, %s32, 5
        %s524 = smul.addr %s523, 2
        %s525 = smul.addr %s524, 8
        %s526 = scalar_lea.vmem %s3, %s525
        %p527 = scmp.lt.s32.totalorder %s32, 5
        %s528 = scalar_select %p527, %s32, 5
        %s529 = smul.addr %s528, 8
        %s530 = scalar_lea.vmem %s10, %s529
        %p532 = scmp.eq.s32.totalorder %s32, 0
        // Predicated region
        $region73: #{tpu_custom_call.1} parent=55 // pred_check
          %p533 = pneg %p532
        $region74: #{tpu_custom_call.1} parent=55 // pred_check_branch
          %535 = sbr.rel (%p533) target = $region76
        $region75: #{tpu_custom_call.1} parent=55 // pred_region
          %v536 = vld [vmem:[%s0] sm:$0x1]
          %v537 = vld [vmem:[%s2] sm:$0x1]
          %v538 = vmul.f32 %v536, %v536
          %vm539 = vcmask 1040384
          %v540 = vsel %vm539, %v538, 0.0
          %541 = vadd.xlane.f32.xlu0 %v540
          %v542 = vpop.xlane.xlu0 %541
          %v543 = vrcp.pop 128.0
          %v544 = vmul.f32 %v542, %v543
          %v545 = vadd.f32 %v544, 1e-05
          %v546 = vrsqrt.pop %v545
          %v547 = vmul.f32 %v536, %v546
          %v548 = vmul.f32 %v537, %v547
          %549 = vst [vmem:[#allocation2] sm:$0x1] %v548
        $region76: #{tpu_custom_call.1} parent=55 // pred_fallthru
          _
        %v550 = vld [vmem:[#allocation2] sm:$0x1]
        %v551 = vld [vmem:[%s526] sm:$0x1]
        %v552 = vmul.f32 %v550, %v550
        %vm553 = vcmask 1040384
        %v554 = vsel %vm553, %v552, 0.0
        %555 = vadd.xlane.f32.xlu0 %v554
        %v556 = vpop.xlane.xlu0 %555
        %v557 = vrcp.pop 128.0
        %v558 = vmul.f32 %v556, %v557
        %v559 = vadd.f32 %v558, 1e-05
        %v560 = vrsqrt.pop %v559
        %v561 = vmul.f32 %v550, %v560
        %v562 = vmul.f32 %v551, %v561
        %v563 = vld [vmem:[%s521 + $0x1] sm:$0x1]
        %v564 = vsub.f32 %v562, %v563
        %v565 = vld [vmem:[%s526 + $0x2] sm:$0x7]
        %v566 = vlaneseq
        %v567 = vshrl.u32 %v566, 7
        %v568 = vsub.s32 0, %v567
        %v569 = vrot.slane %v564, %v568
        %v570 = vmul.f32 %v565, %v569
        %v571 = vlaneseq
        %v572 = vshrl.u32 %v571, 7
        %v573 = vsub.s32 0, %v572
        %v574 = vrot.slane %v563, %v573
        %v575 = vadd.f32 %v574, %v570
        %v576 = vpack.c.bf16 %v575, %v575
        %v577 = vld [vmem:[%s431] sm:$0xff]
        %v578 = vld [vmem:[%s431 + $0x8] sm:$0xf]
        %v579 = vld [vmem:[%s431 + $0xc] sm:$0xff]
        %v580 = vld [vmem:[%s431 + $0x14] sm:$0xf]
        %v581 = vld [vmem:[%s431 + $0x18] sm:$0xff]
        %v582 = vld [vmem:[%s431 + $0x20] sm:$0xf]
        %v583 = vld [vmem:[%s431 + $0x24] sm:$0xff]
        %v584 = vld [vmem:[%s431 + $0x2c] sm:$0xf]
        %v585 = vld [vmem:[%s431 + $0x30] sm:$0xff]
        %v586 = vld [vmem:[%s431 + $0x38] sm:$0xf]
        %v587 = vld [vmem:[%s431 + $0x3c] sm:$0xff]
        %v588 = vld [vmem:[%s431 + $0x44] sm:$0xf]
        %v589 = vld [vmem:[%s431 + $0x48] sm:$0xff]
        %v590 = vld [vmem:[%s431 + $0x50] sm:$0xf]
        %v591 = vld [vmem:[%s431 + $0x54] sm:$0xff]
        %v592 = vld [vmem:[%s431 + $0x5c] sm:$0xf]
        %v593 = vld [vmem:[%s431 + $0x60] sm:$0xff]
        %v594 = vld [vmem:[%s431 + $0x68] sm:$0xf]
        %v595 = vld [vmem:[%s431 + $0x6c] sm:$0xff]
        %v596 = vld [vmem:[%s431 + $0x74] sm:$0xf]
        %v597 = vld [vmem:[%s431 + $0x78] sm:$0xff]
        %v598 = vld [vmem:[%s431 + $0x80] sm:$0xf]
        %v599 = vld [vmem:[%s431 + $0x84] sm:$0xff]
        %v600 = vld [vmem:[%s431 + $0x8c] sm:$0xf]
        %v601 = vld [vmem:[%s431 + $0x90] sm:$0xff]
        %v602 = vld [vmem:[%s431 + $0x98] sm:$0xf]
        %v603 = vld [vmem:[%s431 + $0x9c] sm:$0xff]
        %v604 = vld [vmem:[%s431 + $0xa4] sm:$0xf]
        %v605 = vld [vmem:[%s431 + $0xa8] sm:$0xff]
        %v606 = vld [vmem:[%s431 + $0xb0] sm:$0xf]
        %v607 = vld [vmem:[%s431 + $0xb4] sm:$0xff]
        %v608 = vld [vmem:[%s431 + $0xbc] sm:$0xf]
        %v641 = vunpack.c.l.b16 %v577
        %v642 = vunpack.c.h.b16 %v577
        %v643 = vunpack.c.l.b16 %v578
        %v644 = vunpack.c.l.b16 %v579
        %v645 = vunpack.c.h.b16 %v579
        %v646 = vunpack.c.l.b16 %v580
        %v647 = vunpack.c.l.b16 %v581
        %v648 = vunpack.c.h.b16 %v581
        %v649 = vunpack.c.l.b16 %v582
        %v650 = vunpack.c.l.b16 %v583
        %v651 = vunpack.c.h.b16 %v583
        %v652 = vunpack.c.l.b16 %v584
        %v653 = vunpack.c.l.b16 %v585
        %v654 = vunpack.c.h.b16 %v585
        %v655 = vunpack.c.l.b16 %v586
        %v656 = vunpack.c.l.b16 %v587
        %v657 = vunpack.c.h.b16 %v587
        %v658 = vunpack.c.l.b16 %v588
        %v659 = vunpack.c.l.b16 %v589
        %v660 = vunpack.c.h.b16 %v589
        %v661 = vunpack.c.l.b16 %v590
        %v662 = vunpack.c.l.b16 %v591
        %v663 = vunpack.c.h.b16 %v591
        %v664 = vunpack.c.l.b16 %v592
        %v665 = vunpack.c.l.b16 %v593
        %v666 = vunpack.c.h.b16 %v593
        %v667 = vunpack.c.l.b16 %v594
        %v668 = vunpack.c.l.b16 %v595
        %v669 = vunpack.c.h.b16 %v595
        %v670 = vunpack.c.l.b16 %v596
        %v671 = vunpack.c.l.b16 %v597
        %v672 = vunpack.c.h.b16 %v597
        %v673 = vunpack.c.l.b16 %v598
        %v674 = vunpack.c.l.b16 %v599
        %v675 = vunpack.c.h.b16 %v599
        %v676 = vunpack.c.l.b16 %v600
        %v677 = vunpack.c.l.b16 %v601
        %v678 = vunpack.c.h.b16 %v601
        %v679 = vunpack.c.l.b16 %v602
        %v680 = vunpack.c.l.b16 %v603
        %v681 = vunpack.c.h.b16 %v603
        %v682 = vunpack.c.l.b16 %v604
        %v683 = vunpack.c.l.b16 %v605
        %v684 = vunpack.c.h.b16 %v605
        %v685 = vunpack.c.l.b16 %v606
        %v686 = vunpack.c.l.b16 %v607
        %v687 = vunpack.c.h.b16 %v607
        %v688 = vunpack.c.l.b16 %v608
        %v689 = vpack.c.b16 %v644, %v641
        %v690 = vpack.c.b16 %v645, %v642
        %v691 = vpack.c.b16 %v646, %v643
        %v692 = vpack.c.b16 %v650, %v647
        %v693 = vpack.c.b16 %v651, %v648
        %v694 = vpack.c.b16 %v652, %v649
        %v695 = vpack.c.b16 %v656, %v653
        %v696 = vpack.c.b16 %v657, %v654
        %v697 = vpack.c.b16 %v658, %v655
        %v698 = vpack.c.b16 %v662, %v659
        %v699 = vpack.c.b16 %v663, %v660
        %v700 = vpack.c.b16 %v664, %v661
        %v701 = vpack.c.b16 %v668, %v665
        %v702 = vpack.c.b16 %v669, %v666
        %v703 = vpack.c.b16 %v670, %v667
        %v704 = vpack.c.b16 %v674, %v671
        %v705 = vpack.c.b16 %v675, %v672
        %v706 = vpack.c.b16 %v676, %v673
        %v707 = vpack.c.b16 %v680, %v677
        %v708 = vpack.c.b16 %v681, %v678
        %v709 = vpack.c.b16 %v682, %v679
        %v710 = vpack.c.b16 %v686, %v683
        %v711 = vpack.c.b16 %v687, %v684
        %v712 = vpack.c.b16 %v688, %v685
        %737 = vmatprep.subr.bf16.mxu0 %v690
        %738 = vmatpush1.bf16.msra.mxu0 %v689
        %739 = vmatprep.subr.bf16.mxu0 %v693
        %740 = vmatpush1.bf16.msra.mxu0 %v692
        %741 = vmatprep.subr.bf16.mxu0 %v696
        %742 = vmatpush1.bf16.msra.mxu0 %v695
        %743 = vmatprep.subr.bf16.mxu0 %v699
        %744 = vmatpush1.bf16.msra.mxu0 %v698
        %745 = vmatprep.subr.bf16.mxu0 %v702
        %746 = vmatpush1.bf16.msra.mxu0 %v701
        %747 = vmatprep.subr.bf16.mxu0 %v705
        %748 = vmatpush1.bf16.msra.mxu0 %v704
        %749 = vmatprep.subr.bf16.mxu0 %v708
        %750 = vmatpush1.bf16.msra.mxu0 %v707
        %751 = vmatprep.subr.bf16.mxu0 %v711
        %752 = vmatpush1.bf16.msra.mxu0 %v710
        %753 = vmatprep.subr.bf16.mxu0 0
        %754 = vmatpush1.bf16.msra.mxu0 0
        %755 = vmatprep.subr.bf16.mxu0 0
        %756 = vmatpush1.bf16.msra.mxu0 0
        %757 = vmatprep.subr.bf16.mxu0 0
        %758 = vmatpush1.bf16.msra.mxu0 0
        %759 = vmatprep.subr.bf16.mxu0 0
        %760 = vmatpush1.bf16.msra.mxu0 0
        %761 = vmatprep.subr.bf16.mxu0 0
        %762 = vmatpush1.bf16.msra.mxu0 0
        %763 = vmatprep.subr.bf16.mxu0 0
        %764 = vmatpush1.bf16.msra.mxu0 0
        %765 = vmatprep.subr.bf16.mxu0 0
        %766 = vmatpush1.bf16.msra.mxu0 0
        %767 = vmatprep.subr.bf16.mxu0 0
        %768 = vmatpush1.bf16.msra.mxu0 0
        %769 = vmatprep.mubr.bf16.mxu0 0
        %770 = vmatmul.mubr.bf16.gmra.mrb[0].mxu0 %v576
        %v771 = vpop.f32.mrb[0].mxu0
        %v772 = vadd.f32 0.0, %v771
        %v773 = vpop.f32.mrb[0].mxu0
        %v774 = vadd.f32 0.0, %v773
        %v775 = vpop.f32.mrb[0].mxu0
        %v776 = vpop.f32.mrb[0].mxu0
        %777 = vdwg.mxu0
        %778 = vmatprep.subr.bf16.mxu0 0
        %779 = vmatpush1.bf16.msra.mxu0 %v691
        %780 = vmatprep.subr.bf16.mxu0 0
        %781 = vmatpush1.bf16.msra.mxu0 %v694
        %782 = vmatprep.subr.bf16.mxu0 0
        %783 = vmatpush1.bf16.msra.mxu0 %v697
        %784 = vmatprep.subr.bf16.mxu0 0
        %785 = vmatpush1.bf16.msra.mxu0 %v700
        %786 = vmatprep.subr.bf16.mxu0 0
        %787 = vmatpush1.bf16.msra.mxu0 %v703
        %788 = vmatprep.subr.bf16.mxu0 0
        %789 = vmatpush1.bf16.msra.mxu0 %v706
        %790 = vmatprep.subr.bf16.mxu0 0
        %791 = vmatpush1.bf16.msra.mxu0 %v709
        %792 = vmatprep.subr.bf16.mxu0 0
        %793 = vmatpush1.bf16.msra.mxu0 %v712
        %794 = vmatprep.subr.bf16.mxu0 0
        %795 = vmatpush1.bf16.msra.mxu0 0
        %796 = vmatprep.subr.bf16.mxu0 0
        %797 = vmatpush1.bf16.msra.mxu0 0
        %798 = vmatprep.subr.bf16.mxu0 0
        %799 = vmatpush1.bf16.msra.mxu0 0
        %800 = vmatprep.subr.bf16.mxu0 0
        %801 = vmatpush1.bf16.msra.mxu0 0
        %802 = vmatprep.subr.bf16.mxu0 0
        %803 = vmatpush1.bf16.msra.mxu0 0
        %804 = vmatprep.subr.bf16.mxu0 0
        %805 = vmatpush1.bf16.msra.mxu0 0
        %806 = vmatprep.subr.bf16.mxu0 0
        %807 = vmatpush1.bf16.msra.mxu0 0
        %808 = vmatprep.subr.bf16.mxu0 0
        %809 = vmatpush1.bf16.msra.mxu0 0
        %810 = vmatprep.mubr.bf16.mxu0 0
        %811 = vmatmul.mubr.bf16.gmra.mrb[0].mxu0 %v576
        %v812 = vpop.f32.mrb[0].mxu0
        %v813 = vadd.f32 0.0, %v812
        %v814 = vpop.f32.mrb[0].mxu0
        %v815 = vpop.f32.mrb[0].mxu0
        %v816 = vpop.f32.mrb[0].mxu0
        %817 = vdwg.mxu0
        %v818 = vsub.f32 0.0, %v772
        %v819 = vmul.f32 %v818, 1.442695
        %v820 = vpow.pop %v819
        %v821 = vadd.f32 %v820, 1.0
        %v822 = vrcp.pop %v821
        %v823 = vmul.f32 1.0, %v822
        %v824 = vld [vmem:[%s521 + $0x2] sm:$0x1]
        %v825 = vld [vmem:[%s521 + $0x3] sm:$0x1]
        %v826 = vld [vmem:[%s521 + $0x4] sm:$0x1]
        %v827 = vld [vmem:[%s526 + $0x5] sm:$0x1]
        %v828 = vld [vmem:[%s526 + $0x6] sm:$0x1]
        %v830 = vrot.slane %v774, 1
        %v832 = vadd.f32 %v827, %v830
        %v833 = vmax.f32 %v826, %v832
        %v834 = vsub.f32 %v826, %v833
        %v835 = vmul.f32 %v834, 1.442695
        %v836 = vpow.pop %v835
        %v837 = vsub.f32 %v832, %v833
        %v838 = vmul.f32 %v837, 1.442695
        %v839 = vpow.pop %v838
        %v840 = vmul.f32 %v836, %v824
        %v842 = vrot.slane %v813, 2
        %v844 = vmul.f32 %v839, %v842
        %v845 = vadd.f32 %v840, %v844
        %v846 = vmul.f32 %v836, %v825
        %v847 = vadd.f32 %v846, %v839
        %v848 = vadd.f32 %v826, %v828
        %v849 = vmax.f32 %v848, %v830
        %v850 = vsub.f32 %v848, %v849
        %v851 = vmul.f32 %v850, 1.442695
        %v852 = vpow.pop %v851
        %v854 = vrot.slane %v849, 7
        %v856 = vsub.f32 %v774, %v854
        %v857 = vmul.f32 %v856, 1.442695
        %v858 = vpow.pop %v857
        %v859 = vmul.f32 %v852, %v824
        %v860 = vrot.slane %v813, 1
        %v862 = vmul.f32 %v858, %v860
        %v864 = vrot.slane %v862, 1
        %v866 = vadd.f32 %v859, %v864
        %v867 = vmul.f32 %v852, %v825
        %v869 = vrot.slane %v858, 1
        %v871 = vadd.f32 %v867, %v869
        %v872 = vrcp.pop %v847
        %v873 = vmul.f32 %v845, %v872
        %v874 = vmul.f32 %v823, %v873
        %v875 = vpack.c.bf16 %v874, %v874
        %v876 = vld [vmem:[%s440] sm:$0xf]
        %v877 = vld [vmem:[%s440 + $0x4] sm:$0xf]
        %v878 = vld [vmem:[%s440 + $0x8] sm:$0xf]
        %v879 = vld [vmem:[%s440 + $0xc] sm:$0xf]
        %v880 = vld [vmem:[%s440 + $0x10] sm:$0xf]
        %v881 = vld [vmem:[%s440 + $0x14] sm:$0xf]
        %v882 = vld [vmem:[%s440 + $0x18] sm:$0xf]
        %v883 = vld [vmem:[%s440 + $0x1c] sm:$0xf]
        %v884 = vld [vmem:[%s440 + $0x20] sm:$0xf]
        %v885 = vld [vmem:[%s440 + $0x24] sm:$0xf]
        %v886 = vld [vmem:[%s440 + $0x28] sm:$0xf]
        %v887 = vld [vmem:[%s440 + $0x2c] sm:$0xf]
        %v888 = vld [vmem:[%s440 + $0x30] sm:$0xf]
        %v889 = vld [vmem:[%s440 + $0x34] sm:$0xf]
        %v890 = vld [vmem:[%s440 + $0x38] sm:$0xf]
        %v891 = vld [vmem:[%s440 + $0x3c] sm:$0xf]
        %v908 = vunpack.c.l.b16 %v876
        %v909 = vunpack.c.l.b16 %v877
        %v910 = vunpack.c.l.b16 %v878
        %v911 = vunpack.c.l.b16 %v879
        %v912 = vunpack.c.l.b16 %v880
        %v913 = vunpack.c.l.b16 %v881
        %v914 = vunpack.c.l.b16 %v882
        %v915 = vunpack.c.l.b16 %v883
        %v916 = vunpack.c.l.b16 %v884
        %v917 = vunpack.c.l.b16 %v885
        %v918 = vunpack.c.l.b16 %v886
        %v919 = vunpack.c.l.b16 %v887
        %v920 = vunpack.c.l.b16 %v888
        %v921 = vunpack.c.l.b16 %v889
        %v922 = vunpack.c.l.b16 %v890
        %v923 = vunpack.c.l.b16 %v891
        %v924 = vpack.c.b16 %v909, %v908
        %v925 = vpack.c.b16 %v911, %v910
        %v926 = vpack.c.b16 %v913, %v912
        %v927 = vpack.c.b16 %v915, %v914
        %v928 = vpack.c.b16 %v917, %v916
        %v929 = vpack.c.b16 %v919, %v918
        %v930 = vpack.c.b16 %v921, %v920
        %v931 = vpack.c.b16 %v923, %v922
        %940 = vmatprep.subr.bf16.mxu0 0
        %941 = vmatpush1.bf16.msra.mxu0 %v924
        %942 = vmatprep.subr.bf16.mxu0 0
        %943 = vmatpush1.bf16.msra.mxu0 %v925
        %944 = vmatprep.subr.bf16.mxu0 0
        %945 = vmatpush1.bf16.msra.mxu0 %v926
        %946 = vmatprep.subr.bf16.mxu0 0
        %947 = vmatpush1.bf16.msra.mxu0 %v927
        %948 = vmatprep.subr.bf16.mxu0 0
        %949 = vmatpush1.bf16.msra.mxu0 %v928
        %950 = vmatprep.subr.bf16.mxu0 0
        %951 = vmatpush1.bf16.msra.mxu0 %v929
        %952 = vmatprep.subr.bf16.mxu0 0
        %953 = vmatpush1.bf16.msra.mxu0 %v930
        %954 = vmatprep.subr.bf16.mxu0 0
        %955 = vmatpush1.bf16.msra.mxu0 %v931
        %956 = vmatprep.subr.bf16.mxu0 0
        %957 = vmatpush1.bf16.msra.mxu0 0
        %958 = vmatprep.subr.bf16.mxu0 0
        %959 = vmatpush1.bf16.msra.mxu0 0
        %960 = vmatprep.subr.bf16.mxu0 0
        %961 = vmatpush1.bf16.msra.mxu0 0
        %962 = vmatprep.subr.bf16.mxu0 0
        %963 = vmatpush1.bf16.msra.mxu0 0
        %964 = vmatprep.subr.bf16.mxu0 0
        %965 = vmatpush1.bf16.msra.mxu0 0
        %966 = vmatprep.subr.bf16.mxu0 0
        %967 = vmatpush1.bf16.msra.mxu0 0
        %968 = vmatprep.subr.bf16.mxu0 0
        %969 = vmatpush1.bf16.msra.mxu0 0
        %970 = vmatprep.subr.bf16.mxu0 0
        %971 = vmatpush1.bf16.msra.mxu0 0
        %972 = vmatprep.mubr.bf16.mxu0 0
        %973 = vmatmul.mubr.bf16.gmra.mrb[0].mxu0 %v875
        %v974 = vpop.f32.mrb[0].mxu0
        %v975 = vadd.f32 0.0, %v974
        %v976 = vpop.f32.mrb[0].mxu0
        %v977 = vpop.f32.mrb[0].mxu0
        %v978 = vpop.f32.mrb[0].mxu0
        %979 = vdwg.mxu0
        %v980 = vadd.f32 %v550, %v975
        %v981 = vld [vmem:[%s526 + $0x1] sm:$0x1]
        %v982 = vmul.f32 %v980, %v980
        %v983 = vsel %vm553, %v982, 0.0
        %984 = vadd.xlane.f32.xlu0 %v983
        %v985 = vpop.xlane.xlu0 %984
        %v986 = vmul.f32 %v985, %v557
        %v987 = vadd.f32 %v986, 1e-05
        %v988 = vrsqrt.pop %v987
        %v989 = vmul.f32 %v980, %v988
        %v990 = vmul.f32 %v981, %v989
        %v991 = vld [vmem:[%s521] sm:$0x1]
        %v992 = vsub.f32 %v990, %v991
        %v993 = vld [vmem:[%s526 + $0x7] sm:$0x3]
        %v994 = vlaneseq
        %v995 = vshrl.u32 %v994, 7
        %v996 = vsub.s32 0, %v995
        %v997 = vrot.slane %v992, %v996
        %v998 = vmul.f32 %v993, %v997
        %v999 = vlaneseq
        %v1000 = vshrl.u32 %v999, 7
        %v1001 = vsub.s32 0, %v1000
        %v1002 = vrot.slane %v991, %v1001
        %v1003 = vadd.f32 %v1002, %v998
        %v1004 = vpack.c.bf16 %v1003, %v1003
        %v1005 = vld [vmem:[%s449] sm:$0xff]
        %v1006 = vld [vmem:[%s449 + $0x8] sm:$0xff]
        %v1007 = vld [vmem:[%s449 + $0x10] sm:$0xf]
        %v1008 = vld [vmem:[%s449 + $0x14] sm:$0xff]
        %v1009 = vld [vmem:[%s449 + $0x1c] sm:$0xff]
        %v1010 = vld [vmem:[%s449 + $0x24] sm:$0xf]
        %v1011 = vld [vmem:[%s449 + $0x28] sm:$0xff]
        %v1012 = vld [vmem:[%s449 + $0x30] sm:$0xff]
        %v1013 = vld [vmem:[%s449 + $0x38] sm:$0xf]
        %v1014 = vld [vmem:[%s449 + $0x3c] sm:$0xff]
        %v1015 = vld [vmem:[%s449 + $0x44] sm:$0xff]
        %v1016 = vld [vmem:[%s449 + $0x4c] sm:$0xf]
        %v1017 = vld [vmem:[%s449 + $0x50] sm:$0xff]
        %v1018 = vld [vmem:[%s449 + $0x58] sm:$0xff]
        %v1019 = vld [vmem:[%s449 + $0x60] sm:$0xf]
        %v1020 = vld [vmem:[%s449 + $0x64] sm:$0xff]
        %v1021 = vld [vmem:[%s449 + $0x6c] sm:$0xff]
        %v1022 = vld [vmem:[%s449 + $0x74] sm:$0xf]
        %v1023 = vld [vmem:[%s449 + $0x78] sm:$0xff]
        %v1024 = vld [vmem:[%s449 + $0x80] sm:$0xff]
        %v1025 = vld [vmem:[%s449 + $0x88] sm:$0xf]
        %v1026 = vld [vmem:[%s449 + $0x8c] sm:$0xff]
        %v1027 = vld [vmem:[%s449 + $0x94] sm:$0xff]
        %v1028 = vld [vmem:[%s449 + $0x9c] sm:$0xf]
        %v1029 = vld [vmem:[%s449 + $0xa0] sm:$0xff]
        %v1030 = vld [vmem:[%s449 + $0xa8] sm:$0xff]
        %v1031 = vld [vmem:[%s449 + $0xb0] sm:$0xf]
        %v1032 = vld [vmem:[%s449 + $0xb4] sm:$0xff]
        %v1033 = vld [vmem:[%s449 + $0xbc] sm:$0xff]
        %v1034 = vld [vmem:[%s449 + $0xc4] sm:$0xf]
        %v1035 = vld [vmem:[%s449 + $0xc8] sm:$0xff]
        %v1036 = vld [vmem:[%s449 + $0xd0] sm:$0xff]
        %v1037 = vld [vmem:[%s449 + $0xd8] sm:$0xf]
        %v1038 = vld [vmem:[%s449 + $0xdc] sm:$0xff]
        %v1039 = vld [vmem:[%s449 + $0xe4] sm:$0xff]
        %v1040 = vld [vmem:[%s449 + $0xec] sm:$0xf]
        %v1041 = vld [vmem:[%s449 + $0xf0] sm:$0xff]
        %v1042 = vld [vmem:[%s449 + $0xf8] sm:$0xff]
        %v1043 = vld [vmem:[%s449 + $0x100] sm:$0xf]
        %v1044 = vld [vmem:[%s449 + $0x104] sm:$0xff]
        %v1045 = vld [vmem:[%s449 + $0x10c] sm:$0xff]
        %v1046 = vld [vmem:[%s449 + $0x114] sm:$0xf]
        %v1047 = vld [vmem:[%s449 + $0x118] sm:$0xff]
        %v1048 = vld [vmem:[%s449 + $0x120] sm:$0xff]
        %v1049 = vld [vmem:[%s449 + $0x128] sm:$0xf]
        %v1050 = vld [vmem:[%s449 + $0x12c] sm:$0xff]
        %v1051 = vld [vmem:[%s449 + $0x134] sm:$0xff]
        %v1052 = vld [vmem:[%s449 + $0x13c] sm:$0xf]
        %v1101 = vunpack.c.l.b16 %v1005
        %v1102 = vunpack.c.h.b16 %v1005
        %v1103 = vunpack.c.l.b16 %v1006
        %v1104 = vunpack.c.h.b16 %v1006
        %v1105 = vunpack.c.l.b16 %v1007
        %v1106 = vunpack.c.l.b16 %v1008
        %v1107 = vunpack.c.h.b16 %v1008
        %v1108 = vunpack.c.l.b16 %v1009
        %v1109 = vunpack.c.h.b16 %v1009
        %v1110 = vunpack.c.l.b16 %v1010
        %v1111 = vunpack.c.l.b16 %v1011
        %v1112 = vunpack.c.h.b16 %v1011
        %v1113 = vunpack.c.l.b16 %v1012
        %v1114 = vunpack.c.h.b16 %v1012
        %v1115 = vunpack.c.l.b16 %v1013
        %v1116 = vunpack.c.l.b16 %v1014
        %v1117 = vunpack.c.h.b16 %v1014
        %v1118 = vunpack.c.l.b16 %v1015
        %v1119 = vunpack.c.h.b16 %v1015
        %v1120 = vunpack.c.l.b16 %v1016
        %v1121 = vunpack.c.l.b16 %v1017
        %v1122 = vunpack.c.h.b16 %v1017
        %v1123 = vunpack.c.l.b16 %v1018
        %v1124 = vunpack.c.h.b16 %v1018
        %v1125 = vunpack.c.l.b16 %v1019
        %v1126 = vunpack.c.l.b16 %v1020
        %v1127 = vunpack.c.h.b16 %v1020
        %v1128 = vunpack.c.l.b16 %v1021
        %v1129 = vunpack.c.h.b16 %v1021
        %v1130 = vunpack.c.l.b16 %v1022
        %v1131 = vunpack.c.l.b16 %v1023
        %v1132 = vunpack.c.h.b16 %v1023
        %v1133 = vunpack.c.l.b16 %v1024
        %v1134 = vunpack.c.h.b16 %v1024
        %v1135 = vunpack.c.l.b16 %v1025
        %v1136 = vunpack.c.l.b16 %v1026
        %v1137 = vunpack.c.h.b16 %v1026
        %v1138 = vunpack.c.l.b16 %v1027
        %v1139 = vunpack.c.h.b16 %v1027
        %v1140 = vunpack.c.l.b16 %v1028
        %v1141 = vunpack.c.l.b16 %v1029
        %v1142 = vunpack.c.h.b16 %v1029
        %v1143 = vunpack.c.l.b16 %v1030
        %v1144 = vunpack.c.h.b16 %v1030
        %v1145 = vunpack.c.l.b16 %v1031
        %v1146 = vunpack.c.l.b16 %v1032
        %v1147 = vunpack.c.h.b16 %v1032
        %v1148 = vunpack.c.l.b16 %v1033
        %v1149 = vunpack.c.h.b16 %v1033
        %v1150 = vunpack.c.l.b16 %v1034
        %v1151 = vunpack.c.l.b16 %v1035
        %v1152 = vunpack.c.h.b16 %v1035
        %v1153 = vunpack.c.l.b16 %v1036
        %v1154 = vunpack.c.h.b16 %v1036
        %v1155 = vunpack.c.l.b16 %v1037
        %v1156 = vunpack.c.l.b16 %v1038
        %v1157 = vunpack.c.h.b16 %v1038
        %v1158 = vunpack.c.l.b16 %v1039
        %v1159 = vunpack.c.h.b16 %v1039
        %v1160 = vunpack.c.l.b16 %v1040
        %v1161 = vunpack.c.l.b16 %v1041
        %v1162 = vunpack.c.h.b16 %v1041
        %v1163 = vunpack.c.l.b16 %v1042
        %v1164 = vunpack.c.h.b16 %v1042
        %v1165 = vunpack.c.l.b16 %v1043
        %v1166 = vunpack.c.l.b16 %v1044
        %v1167 = vunpack.c.h.b16 %v1044
        %v1168 = vunpack.c.l.b16 %v1045
        %v1169 = vunpack.c.h.b16 %v1045
        %v1170 = vunpack.c.l.b16 %v1046
        %v1171 = vunpack.c.l.b16 %v1047
        %v1172 = vunpack.c.h.b16 %v1047
        %v1173 = vunpack.c.l.b16 %v1048
        %v1174 = vunpack.c.h.b16 %v1048
        %v1175 = vunpack.c.l.b16 %v1049
        %v1176 = vunpack.c.l.b16 %v1050
        %v1177 = vunpack.c.h.b16 %v1050
        %v1178 = vunpack.c.l.b16 %v1051
        %v1179 = vunpack.c.h.b16 %v1051
        %v1180 = vunpack.c.l.b16 %v1052
        %v1181 = vpack.c.b16 %v1106, %v1101
        %v1182 = vpack.c.b16 %v1107, %v1102
        %v1183 = vpack.c.b16 %v1108, %v1103
        %v1184 = vpack.c.b16 %v1109, %v1104
        %v1185 = vpack.c.b16 %v1110, %v1105
        %v1186 = vpack.c.b16 %v1116, %v1111
        %v1187 = vpack.c.b16 %v1117, %v1112
        %v1188 = vpack.c.b16 %v1118, %v1113
        %v1189 = vpack.c.b16 %v1119, %v1114
        %v1190 = vpack.c.b16 %v1120, %v1115
        %v1191 = vpack.c.b16 %v1126, %v1121
        %v1192 = vpack.c.b16 %v1127, %v1122
        %v1193 = vpack.c.b16 %v1128, %v1123
        %v1194 = vpack.c.b16 %v1129, %v1124
        %v1195 = vpack.c.b16 %v1130, %v1125
        %v1196 = vpack.c.b16 %v1136, %v1131
        %v1197 = vpack.c.b16 %v1137, %v1132
        %v1198 = vpack.c.b16 %v1138, %v1133
        %v1199 = vpack.c.b16 %v1139, %v1134
        %v1200 = vpack.c.b16 %v1140, %v1135
        %v1201 = vpack.c.b16 %v1146, %v1141
        %v1202 = vpack.c.b16 %v1147, %v1142
        %v1203 = vpack.c.b16 %v1148, %v1143
        %v1204 = vpack.c.b16 %v1149, %v1144
        %v1205 = vpack.c.b16 %v1150, %v1145
        %v1206 = vpack.c.b16 %v1156, %v1151
        %v1207 = vpack.c.b16 %v1157, %v1152
        %v1208 = vpack.c.b16 %v1158, %v1153
        %v1209 = vpack.c.b16 %v1159, %v1154
        %v1210 = vpack.c.b16 %v1160, %v1155
        %v1211 = vpack.c.b16 %v1166, %v1161
        %v1212 = vpack.c.b16 %v1167, %v1162
        %v1213 = vpack.c.b16 %v1168, %v1163
        %v1214 = vpack.c.b16 %v1169, %v1164
        %v1215 = vpack.c.b16 %v1170, %v1165
        %v1216 = vpack.c.b16 %v1176, %v1171
        %v1217 = vpack.c.b16 %v1177, %v1172
        %v1218 = vpack.c.b16 %v1178, %v1173
        %v1219 = vpack.c.b16 %v1179, %v1174
        %v1220 = vpack.c.b16 %v1180, %v1175
        %1261 = vmatprep.subr.bf16.mxu0 %v1182
        %1262 = vmatpush1.bf16.msra.mxu0 %v1181
        %1263 = vmatprep.subr.bf16.mxu0 %v1187
        %1264 = vmatpush1.bf16.msra.mxu0 %v1186
        %1265 = vmatprep.subr.bf16.mxu0 %v1192
        %1266 = vmatpush1.bf16.msra.mxu0 %v1191
        %1267 = vmatprep.subr.bf16.mxu0 %v1197
        %1268 = vmatpush1.bf16.msra.mxu0 %v1196
        %1269 = vmatprep.subr.bf16.mxu0 %v1202
        %1270 = vmatpush1.bf16.msra.mxu0 %v1201
        %1271 = vmatprep.subr.bf16.mxu0 %v1207
        %1272 = vmatpush1.bf16.msra.mxu0 %v1206
        %1273 = vmatprep.subr.bf16.mxu0 %v1212
        %1274 = vmatpush1.bf16.msra.mxu0 %v1211
        %1275 = vmatprep.subr.bf16.mxu0 %v1217
        %1276 = vmatpush1.bf16.msra.mxu0 %v1216
        %1277 = vmatprep.subr.bf16.mxu0 0
        %1278 = vmatpush1.bf16.msra.mxu0 0
        %1279 = vmatprep.subr.bf16.mxu0 0
        %1280 = vmatpush1.bf16.msra.mxu0 0
        %1281 = vmatprep.subr.bf16.mxu0 0
        %1282 = vmatpush1.bf16.msra.mxu0 0
        %1283 = vmatprep.subr.bf16.mxu0 0
        %1284 = vmatpush1.bf16.msra.mxu0 0
        %1285 = vmatprep.subr.bf16.mxu0 0
        %1286 = vmatpush1.bf16.msra.mxu0 0
        %1287 = vmatprep.subr.bf16.mxu0 0
        %1288 = vmatpush1.bf16.msra.mxu0 0
        %1289 = vmatprep.subr.bf16.mxu0 0
        %1290 = vmatpush1.bf16.msra.mxu0 0
        %1291 = vmatprep.subr.bf16.mxu0 0
        %1292 = vmatpush1.bf16.msra.mxu0 0
        %1293 = vmatprep.mubr.bf16.mxu0 0
        %1294 = vmatmul.mubr.bf16.gmra.mrb[0].mxu0 %v1004
        %v1295 = vpop.f32.mrb[0].mxu0
        %v1296 = vadd.f32 0.0, %v1295
        %v1297 = vpop.f32.mrb[0].mxu0
        %v1298 = vadd.f32 0.0, %v1297
        %v1299 = vpop.f32.mrb[0].mxu0
        %v1300 = vpop.f32.mrb[0].mxu0
        %1301 = vdwg.mxu0
        %1302 = vmatprep.subr.bf16.mxu0 %v1184
        %1303 = vmatpush1.bf16.msra.mxu0 %v1183
        %1304 = vmatprep.subr.bf16.mxu0 %v1189
        %1305 = vmatpush1.bf16.msra.mxu0 %v1188
        %1306 = vmatprep.subr.bf16.mxu0 %v1194
        %1307 = vmatpush1.bf16.msra.mxu0 %v1193
        %1308 = vmatprep.subr.bf16.mxu0 %v1199
        %1309 = vmatpush1.bf16.msra.mxu0 %v1198
        %1310 = vmatprep.subr.bf16.mxu0 %v1204
        %1311 = vmatpush1.bf16.msra.mxu0 %v1203
        %1312 = vmatprep.subr.bf16.mxu0 %v1209
        %1313 = vmatpush1.bf16.msra.mxu0 %v1208
        %1314 = vmatprep.subr.bf16.mxu0 %v1214
        %1315 = vmatpush1.bf16.msra.mxu0 %v1213
        %1316 = vmatprep.subr.bf16.mxu0 %v1219
        %1317 = vmatpush1.bf16.msra.mxu0 %v1218
        %1318 = vmatprep.subr.bf16.mxu0 0
        %1319 = vmatpush1.bf16.msra.mxu0 0
        %1320 = vmatprep.subr.bf16.mxu0 0
        %1321 = vmatpush1.bf16.msra.mxu0 0
        %1322 = vmatprep.subr.bf16.mxu0 0
        %1323 = vmatpush1.bf16.msra.mxu0 0
        %1324 = vmatprep.subr.bf16.mxu0 0
        %1325 = vmatpush1.bf16.msra.mxu0 0
        %1326 = vmatprep.subr.bf16.mxu0 0
        %1327 = vmatpush1.bf16.msra.mxu0 0
        %1328 = vmatprep.subr.bf16.mxu0 0
        %1329 = vmatpush1.bf16.msra.mxu0 0
        %1330 = vmatprep.subr.bf16.mxu0 0
        %1331 = vmatpush1.bf16.msra.mxu0 0
        %1332 = vmatprep.subr.bf16.mxu0 0
        %1333 = vmatpush1.bf16.msra.mxu0 0
        %1334 = vmatprep.mubr.bf16.mxu0 0
        %1335 = vmatmul.mubr.bf16.gmra.mrb[0].mxu0 %v1004
        %v1336 = vpop.f32.mrb[0].mxu0
        %v1337 = vadd.f32 0.0, %v1336
        %v1338 = vpop.f32.mrb[0].mxu0
        %v1339 = vadd.f32 0.0, %v1338
        %v1340 = vpop.f32.mrb[0].mxu0
        %v1341 = vpop.f32.mrb[0].mxu0
        %1342 = vdwg.mxu0
        %1343 = vmatprep.subr.bf16.mxu0 0
        %1344 = vmatpush1.bf16.msra.mxu0 %v1185
        %1345 = vmatprep.subr.bf16.mxu0 0
        %1346 = vmatpush1.bf16.msra.mxu0 %v1190
        %1347 = vmatprep.subr.bf16.mxu0 0
        %1348 = vmatpush1.bf16.msra.mxu0 %v1195
        %1349 = vmatprep.subr.bf16.mxu0 0
        %1350 = vmatpush1.bf16.msra.mxu0 %v1200
        %1351 = vmatprep.subr.bf16.mxu0 0
        %1352 = vmatpush1.bf16.msra.mxu0 %v1205
        %1353 = vmatprep.subr.bf16.mxu0 0
        %1354 = vmatpush1.bf16.msra.mxu0 %v1210
        %1355 = vmatprep.subr.bf16.mxu0 0
        %1356 = vmatpush1.bf16.msra.mxu0 %v1215
        %1357 = vmatprep.subr.bf16.mxu0 0
        %1358 = vmatpush1.bf16.msra.mxu0 %v1220
        %1359 = vmatprep.subr.bf16.mxu0 0
        %1360 = vmatpush1.bf16.msra.mxu0 0
        %1361 = vmatprep.subr.bf16.mxu0 0
        %1362 = vmatpush1.bf16.msra.mxu0 0
        %1363 = vmatprep.subr.bf16.mxu0 0
        %1364 = vmatpush1.bf16.msra.mxu0 0
        %1365 = vmatprep.subr.bf16.mxu0 0
        %1366 = vmatpush1.bf16.msra.mxu0 0
        %1367 = vmatprep.subr.bf16.mxu0 0
        %1368 = vmatpush1.bf16.msra.mxu0 0
        %1369 = vmatprep.subr.bf16.mxu0 0
        %1370 = vmatpush1.bf16.msra.mxu0 0
        %1371 = vmatprep.subr.bf16.mxu0 0
        %1372 = vmatpush1.bf16.msra.mxu0 0
        %1373 = vmatprep.subr.bf16.mxu0 0
        %1374 = vmatpush1.bf16.msra.mxu0 0
        %1375 = vmatprep.mubr.bf16.mxu0 0
        %1376 = vmatmul.mubr.bf16.gmra.mrb[0].mxu0 %v1004
        %v1377 = vpop.f32.mrb[0].mxu0
        %v1378 = vadd.f32 0.0, %v1377
        %v1379 = vpop.f32.mrb[0].mxu0
        %v1380 = vpop.f32.mrb[0].mxu0
        %v1381 = vpop.f32.mrb[0].mxu0
        %1382 = vdwg.mxu0
        %v1383 = vsub.f32 0.0, %v1296
        %v1384 = vmul.f32 %v1383, 1.442695
        %v1385 = vpow.pop %v1384
        %v1386 = vadd.f32 %v1385, 1.0
        %v1387 = vrcp.pop %v1386
        %v1388 = vmul.f32 1.0, %v1387
        %v1389 = vmax.f32 %v1298, 0.0
        %v1390 = vmax.f32 %v1337, 0.0
        %v1391 = vmax.f32 %v1339, 0.0
        %v1392 = vmax.f32 %v1378, 0.0
        %v1393 = vmul.f32 %v1389, %v1389
        %v1394 = vmul.f32 %v1390, %v1390
        %v1395 = vmul.f32 %v1391, %v1391
        %v1396 = vmul.f32 %v1392, %v1392
        %v1397 = vpack.c.bf16 %v1393, %v1393
        %v1398 = vpack.c.bf16 %v1394, %v1394
        %v1399 = vpack.c.bf16 %v1395, %v1395
        %v1400 = vpack.c.bf16 %v1396, %v1396
        %v1401 = vld [vmem:[%s458] sm:$0xf]
        %v1402 = vld [vmem:[%s458 + $0x4] sm:$0xf]
        %v1403 = vld [vmem:[%s458 + $0x8] sm:$0xf]
        %v1404 = vld [vmem:[%s458 + $0xc] sm:$0xf]
        %v1405 = vld [vmem:[%s458 + $0x10] sm:$0xf]
        %v1406 = vld [vmem:[%s458 + $0x14] sm:$0xf]
        %v1407 = vld [vmem:[%s458 + $0x18] sm:$0xf]
        %v1408 = vld [vmem:[%s458 + $0x1c] sm:$0xf]
        %v1409 = vld [vmem:[%s458 + $0x20] sm:$0xf]
        %v1410 = vld [vmem:[%s458 + $0x24] sm:$0xf]
        %v1411 = vld [vmem:[%s458 + $0x28] sm:$0xf]
        %v1412 = vld [vmem:[%s458 + $0x2c] sm:$0xf]
        %v1413 = vld [vmem:[%s458 + $0x30] sm:$0xf]
        %v1414 = vld [vmem:[%s458 + $0x34] sm:$0xf]
        %v1415 = vld [vmem:[%s458 + $0x38] sm:$0xf]
        %v1416 = vld [vmem:[%s458 + $0x3c] sm:$0xf]
        %v1417 = vld [vmem:[%s458 + $0x40] sm:$0xf]
        %v1418 = vld [vmem:[%s458 + $0x44] sm:$0xf]
        %v1419 = vld [vmem:[%s458 + $0x48] sm:$0xf]
        %v1420 = vld [vmem:[%s458 + $0x4c] sm:$0xf]
        %v1421 = vld [vmem:[%s458 + $0x50] sm:$0xf]
        %v1422 = vld [vmem:[%s458 + $0x54] sm:$0xf]
        %v1423 = vld [vmem:[%s458 + $0x58] sm:$0xf]
        %v1424 = vld [vmem:[%s458 + $0x5c] sm:$0xf]
        %v1425 = vld [vmem:[%s458 + $0x60] sm:$0xf]
        %v1426 = vld [vmem:[%s458 + $0x64] sm:$0xf]
        %v1427 = vld [vmem:[%s458 + $0x68] sm:$0xf]
        %v1428 = vld [vmem:[%s458 + $0x6c] sm:$0xf]
        %v1429 = vld [vmem:[%s458 + $0x70] sm:$0xf]
        %v1430 = vld [vmem:[%s458 + $0x74] sm:$0xf]
        %v1431 = vld [vmem:[%s458 + $0x78] sm:$0xf]
        %v1432 = vld [vmem:[%s458 + $0x7c] sm:$0xf]
        %v1433 = vld [vmem:[%s458 + $0x80] sm:$0xf]
        %v1434 = vld [vmem:[%s458 + $0x84] sm:$0xf]
        %v1435 = vld [vmem:[%s458 + $0x88] sm:$0xf]
        %v1436 = vld [vmem:[%s458 + $0x8c] sm:$0xf]
        %v1437 = vld [vmem:[%s458 + $0x90] sm:$0xf]
        %v1438 = vld [vmem:[%s458 + $0x94] sm:$0xf]
        %v1439 = vld [vmem:[%s458 + $0x98] sm:$0xf]
        %v1440 = vld [vmem:[%s458 + $0x9c] sm:$0xf]
        %v1441 = vld [vmem:[%s458 + $0xa0] sm:$0xf]
        %v1442 = vld [vmem:[%s458 + $0xa4] sm:$0xf]
        %v1443 = vld [vmem:[%s458 + $0xa8] sm:$0xf]
        %v1444 = vld [vmem:[%s458 + $0xac] sm:$0xf]
        %v1445 = vld [vmem:[%s458 + $0xb0] sm:$0xf]
        %v1446 = vld [vmem:[%s458 + $0xb4] sm:$0xf]
        %v1447 = vld [vmem:[%s458 + $0xb8] sm:$0xf]
        %v1448 = vld [vmem:[%s458 + $0xbc] sm:$0xf]
        %v1449 = vld [vmem:[%s458 + $0xc0] sm:$0xf]
        %v1450 = vld [vmem:[%s458 + $0xc4] sm:$0xf]
        %v1451 = vld [vmem:[%s458 + $0xc8] sm:$0xf]
        %v1452 = vld [vmem:[%s458 + $0xcc] sm:$0xf]
        %v1453 = vld [vmem:[%s458 + $0xd0] sm:$0xf]
        %v1454 = vld [vmem:[%s458 + $0xd4] sm:$0xf]
        %v1455 = vld [vmem:[%s458 + $0xd8] sm:$0xf]
        %v1456 = vld [vmem:[%s458 + $0xdc] sm:$0xf]
        %v1457 = vld [vmem:[%s458 + $0xe0] sm:$0xf]
        %v1458 = vld [vmem:[%s458 + $0xe4] sm:$0xf]
        %v1459 = vld [vmem:[%s458 + $0xe8] sm:$0xf]
        %v1460 = vld [vmem:[%s458 + $0xec] sm:$0xf]
        %v1461 = vld [vmem:[%s458 + $0xf0] sm:$0xf]
        %v1462 = vld [vmem:[%s458 + $0xf4] sm:$0xf]
        %v1463 = vld [vmem:[%s458 + $0xf8] sm:$0xf]
        %v1464 = vld [vmem:[%s458 + $0xfc] sm:$0xf]
        %v1466 = vshrl.u32 %v1397, 16
        %v1469 = vshrl.u32 %v1398, 16
        %v1472 = vshrl.u32 %v1399, 16
        %v1475 = vshrl.u32 %v1400, 16
        %v1545 = vunpack.c.l.b16 %v1401
        %v1546 = vunpack.c.l.b16 %v1402
        %v1547 = vunpack.c.l.b16 %v1403
        %v1548 = vunpack.c.l.b16 %v1404
        %v1549 = vunpack.c.l.b16 %v1405
        %v1550 = vunpack.c.l.b16 %v1406
        %v1551 = vunpack.c.l.b16 %v1407
        %v1552 = vunpack.c.l.b16 %v1408
        %v1553 = vunpack.c.l.b16 %v1409
        %v1554 = vunpack.c.l.b16 %v1410
        %v1555 = vunpack.c.l.b16 %v1411
        %v1556 = vunpack.c.l.b16 %v1412
        %v1557 = vunpack.c.l.b16 %v1413
        %v1558 = vunpack.c.l.b16 %v1414
        %v1559 = vunpack.c.l.b16 %v1415
        %v1560 = vunpack.c.l.b16 %v1416
        %v1561 = vunpack.c.l.b16 %v1417
        %v1562 = vunpack.c.l.b16 %v1418
        %v1563 = vunpack.c.l.b16 %v1419
        %v1564 = vunpack.c.l.b16 %v1420
        %v1565 = vunpack.c.l.b16 %v1421
        %v1566 = vunpack.c.l.b16 %v1422
        %v1567 = vunpack.c.l.b16 %v1423
        %v1568 = vunpack.c.l.b16 %v1424
        %v1569 = vunpack.c.l.b16 %v1425
        %v1570 = vunpack.c.l.b16 %v1426
        %v1571 = vunpack.c.l.b16 %v1427
        %v1572 = vunpack.c.l.b16 %v1428
        %v1573 = vunpack.c.l.b16 %v1429
        %v1574 = vunpack.c.l.b16 %v1430
        %v1575 = vunpack.c.l.b16 %v1431
        %v1576 = vunpack.c.l.b16 %v1432
        %v1577 = vunpack.c.l.b16 %v1433
        %v1578 = vunpack.c.l.b16 %v1434
        %v1579 = vunpack.c.l.b16 %v1435
        %v1580 = vunpack.c.l.b16 %v1436
        %v1581 = vunpack.c.l.b16 %v1437
        %v1582 = vunpack.c.l.b16 %v1438
        %v1583 = vunpack.c.l.b16 %v1439
        %v1584 = vunpack.c.l.b16 %v1440
        %v1585 = vunpack.c.l.b16 %v1441
        %v1586 = vunpack.c.l.b16 %v1442
        %v1587 = vunpack.c.l.b16 %v1443
        %v1588 = vunpack.c.l.b16 %v1444
        %v1589 = vunpack.c.l.b16 %v1445
        %v1590 = vunpack.c.l.b16 %v1446
        %v1591 = vunpack.c.l.b16 %v1447
        %v1592 = vunpack.c.l.b16 %v1448
        %v1593 = vunpack.c.l.b16 %v1449
        %v1594 = vunpack.c.l.b16 %v1450
        %v1595 = vunpack.c.l.b16 %v1451
        %v1596 = vunpack.c.l.b16 %v1452
        %v1597 = vunpack.c.l.b16 %v1453
        %v1598 = vunpack.c.l.b16 %v1454
        %v1599 = vunpack.c.l.b16 %v1455
        %v1600 = vunpack.c.l.b16 %v1456
        %v1601 = vunpack.c.l.b16 %v1457
        %v1602 = vunpack.c.l.b16 %v1458
        %v1603 = vunpack.c.l.b16 %v1459
        %v1604 = vunpack.c.l.b16 %v1460
        %v1605 = vunpack.c.l.b16 %v1461
        %v1606 = vunpack.c.l.b16 %v1462
        %v1607 = vunpack.c.l.b16 %v1463
        %v1608 = vunpack.c.l.b16 %v1464
        %v1609 = vpack.c.b16 %v1546, %v1545
        %v1610 = vpack.c.b16 %v1548, %v1547
        %v1611 = vpack.c.b16 %v1550, %v1549
        %v1612 = vpack.c.b16 %v1552, %v1551
        %v1613 = vpack.c.b16 %v1554, %v1553
        %v1614 = vpack.c.b16 %v1556, %v1555
        %v1615 = vpack.c.b16 %v1558, %v1557
        %v1616 = vpack.c.b16 %v1560, %v1559
        %v1617 = vpack.c.b16 %v1562, %v1561
        %v1618 = vpack.c.b16 %v1564, %v1563
        %v1619 = vpack.c.b16 %v1566, %v1565
        %v1620 = vpack.c.b16 %v1568, %v1567
        %v1621 = vpack.c.b16 %v1570, %v1569
        %v1622 = vpack.c.b16 %v1572, %v1571
        %v1623 = vpack.c.b16 %v1574, %v1573
        %v1624 = vpack.c.b16 %v1576, %v1575
        %v1625 = vpack.c.b16 %v1578, %v1577
        %v1626 = vpack.c.b16 %v1580, %v1579
        %v1627 = vpack.c.b16 %v1582, %v1581
        %v1628 = vpack.c.b16 %v1584, %v1583
        %v1629 = vpack.c.b16 %v1586, %v1585
        %v1630 = vpack.c.b16 %v1588, %v1587
        %v1631 = vpack.c.b16 %v1590, %v1589
        %v1632 = vpack.c.b16 %v1592, %v1591
        %v1633 = vpack.c.b16 %v1594, %v1593
        %v1634 = vpack.c.b16 %v1596, %v1595
        %v1635 = vpack.c.b16 %v1598, %v1597
        %v1636 = vpack.c.b16 %v1600, %v1599
        %v1637 = vpack.c.b16 %v1602, %v1601
        %v1638 = vpack.c.b16 %v1604, %v1603
        %v1639 = vpack.c.b16 %v1606, %v1605
        %v1640 = vpack.c.b16 %v1608, %v1607
        %1673 = vmatprep.subr.bf16.mxu0 0
        %1674 = vmatpush1.bf16.msra.mxu0 %v1609
        %1675 = vmatprep.subr.bf16.mxu0 0
        %1676 = vmatpush1.bf16.msra.mxu0 %v1610
        %1677 = vmatprep.subr.bf16.mxu0 0
        %1678 = vmatpush1.bf16.msra.mxu0 %v1611
        %1679 = vmatprep.subr.bf16.mxu0 0
        %1680 = vmatpush1.bf16.msra.mxu0 %v1612
        %1681 = vmatprep.subr.bf16.mxu0 0
        %1682 = vmatpush1.bf16.msra.mxu0 %v1613
        %1683 = vmatprep.subr.bf16.mxu0 0
        %1684 = vmatpush1.bf16.msra.mxu0 %v1614
        %1685 = vmatprep.subr.bf16.mxu0 0
        %1686 = vmatpush1.bf16.msra.mxu0 %v1615
        %1687 = vmatprep.subr.bf16.mxu0 0
        %1688 = vmatpush1.bf16.msra.mxu0 %v1616
        %1689 = vmatprep.subr.bf16.mxu0 0
        %1690 = vmatpush1.bf16.msra.mxu0 %v1617
        %1691 = vmatprep.subr.bf16.mxu0 0
        %1692 = vmatpush1.bf16.msra.mxu0 %v1618
        %1693 = vmatprep.subr.bf16.mxu0 0
        %1694 = vmatpush1.bf16.msra.mxu0 %v1619
        %1695 = vmatprep.subr.bf16.mxu0 0
        %1696 = vmatpush1.bf16.msra.mxu0 %v1620
        %1697 = vmatprep.subr.bf16.mxu0 0
        %1698 = vmatpush1.bf16.msra.mxu0 %v1621
        %1699 = vmatprep.subr.bf16.mxu0 0
        %1700 = vmatpush1.bf16.msra.mxu0 %v1622
        %1701 = vmatprep.subr.bf16.mxu0 0
        %1702 = vmatpush1.bf16.msra.mxu0 %v1623
        %1703 = vmatprep.subr.bf16.mxu0 0
        %1704 = vmatpush1.bf16.msra.mxu0 %v1624
        %1705 = vmatprep.mubr.bf16.mxu0 %v1469
        %1706 = vmatmul.mubr.bf16.gmra.mrb[0].mxu0 %v1466
        %v1707 = vpop.f32.mrb[0].mxu0
        %v1708 = vadd.f32 0.0, %v1707
        %v1709 = vpop.f32.mrb[0].mxu0
        %v1710 = vpop.f32.mrb[0].mxu0
        %v1711 = vpop.f32.mrb[0].mxu0
        %1712 = vdwg.mxu0
        %1713 = vmatprep.subr.bf16.mxu0 0
        %1714 = vmatpush1.bf16.msra.mxu0 %v1625
        %1715 = vmatprep.subr.bf16.mxu0 0
        %1716 = vmatpush1.bf16.msra.mxu0 %v1626
        %1717 = vmatprep.subr.bf16.mxu0 0
        %1718 = vmatpush1.bf16.msra.mxu0 %v1627
        %1719 = vmatprep.subr.bf16.mxu0 0
        %1720 = vmatpush1.bf16.msra.mxu0 %v1628
        %1721 = vmatprep.subr.bf16.mxu0 0
        %1722 = vmatpush1.bf16.msra.mxu0 %v1629
        %1723 = vmatprep.subr.bf16.mxu0 0
        %1724 = vmatpush1.bf16.msra.mxu0 %v1630
        %1725 = vmatprep.subr.bf16.mxu0 0
        %1726 = vmatpush1.bf16.msra.mxu0 %v1631
        %1727 = vmatprep.subr.bf16.mxu0 0
        %1728 = vmatpush1.bf16.msra.mxu0 %v1632
        %1729 = vmatprep.subr.bf16.mxu0 0
        %1730 = vmatpush1.bf16.msra.mxu0 %v1633
        %1731 = vmatprep.subr.bf16.mxu0 0
        %1732 = vmatpush1.bf16.msra.mxu0 %v1634
        %1733 = vmatprep.subr.bf16.mxu0 0
        %1734 = vmatpush1.bf16.msra.mxu0 %v1635
        %1735 = vmatprep.subr.bf16.mxu0 0
        %1736 = vmatpush1.bf16.msra.mxu0 %v1636
        %1737 = vmatprep.subr.bf16.mxu0 0
        %1738 = vmatpush1.bf16.msra.mxu0 %v1637
        %1739 = vmatprep.subr.bf16.mxu0 0
        %1740 = vmatpush1.bf16.msra.mxu0 %v1638
        %1741 = vmatprep.subr.bf16.mxu0 0
        %1742 = vmatpush1.bf16.msra.mxu0 %v1639
        %1743 = vmatprep.subr.bf16.mxu0 0
        %1744 = vmatpush1.bf16.msra.mxu0 %v1640
        %1745 = vmatprep.mubr.bf16.mxu0 %v1475
        %1746 = vmatmul.mubr.bf16.gmra.mrb[0].mxu0 %v1472
        %v1747 = vpop.f32.mrb[0].mxu0
        %v1748 = vadd.f32 %v1708, %v1747
        %v1749 = vpop.f32.mrb[0].mxu0
        %v1750 = vpop.f32.mrb[0].mxu0
        %v1751 = vpop.f32.mrb[0].mxu0
        %1752 = vdwg.mxu0
        %v1753 = vmul.f32 %v1388, %v1748
        %v1754 = vadd.f32 %v980, %v1753
        %1755 = vst [vmem:[%s530] sm:$0x1] %v990
        %1756 = vst [vmem:[%s530 + $0x1] sm:$0x1] %v562
        %1757 = vst [vmem:[%s530 + $0x2] sm:$0x1] %v866
        %1758 = vst [vmem:[%s530 + $0x3] sm:$0x1] %v871
        %1759 = vst [vmem:[%s530 + $0x4] sm:$0x1] %v849
        %1760 = vst [vmem:[#allocation2] sm:$0x1] %v1754
        %s1761 = sadd.s32 %s32, 1
        %p1762 = scmp.lt.s32.totalorder %s1761, 0
        %s1763 = ssub.s32 0, %s1761
        %s1764 = scalar_select %p1762, %s1763, %s1761
        %s1765 = sdiv.u32.pop %s1764, 6
        %s1766 = srem.u32.pop %s1764, 6
        %s1767 = ssub.s32 0, %s1766
        %s1768 = scalar_select %p1762, %s1767, %s1766
        %p1769 = scmp.ne.s32.totalorder %s1768, 0
        %p1770 = scmp.lt.s32.totalorder %s1768, 0
        %p1771 = pnand %p1770, %p1769
        %p1772 = pneg %p1771
        %s1773 = sadd.s32 %s1768, 6
        %s1774 = scalar_select %p1772, %s1773, %s1768
        %p1775 = scmp.eq.s32.totalorder %s1774, 0
        // Predicated region
        $region77: #{tpu_custom_call.1} parent=55 // pred_check
          %p1776 = pneg %p1775
        $region78: #{tpu_custom_call.1} parent=55 // pred_check_branch
          %1778 = sbr.rel (%p1776) target = $region80
        $region79: #{tpu_custom_call.1} parent=55 // pred_region
          %v1779 = vmul.f32 %v1754, 0.5
          %1780 = vst [vmem:[#allocation2] sm:$0x1] %v1779
        $region80: #{tpu_custom_call.1} parent=55 // pred_fallthru
          _
        %p1781 = scmp.eq.s32.totalorder %s32, 5
        // Predicated region
        $region81: #{tpu_custom_call.1} parent=55 // pred_check
          %p1782 = pneg %p1781
        $region82: #{tpu_custom_call.1} parent=55 // pred_check_branch
          %1784 = sbr.rel (%p1782) target = $region84
        $region83: #{tpu_custom_call.1} parent=55 // pred_region
          %v1785 = vld [vmem:[#allocation2] sm:$0x1]
          %v1786 = vld [vmem:[%s8] sm:$0x1]
          %v1787 = vmul.f32 %v1785, %v1785
          %v1788 = vsel %vm553, %v1787, 0.0
          %1789 = vadd.xlane.f32.xlu0 %v1788
          %v1790 = vpop.xlane.xlu0 %1789
          %v1791 = vmul.f32 %v1790, %v557
          %v1792 = vadd.f32 %v1791, 1e-05
          %v1793 = vrsqrt.pop %v1792
          %v1794 = vmul.f32 %v1785, %v1793
          %v1795 = vmul.f32 %v1786, %v1794
          %1796 = vst [vmem:[#allocation11] sm:$0x1] %v1795
        $region84: #{tpu_custom_call.1} parent=55 // pred_fallthru
          _
        %p1797 = scmp.lt.s32.totalorder %s32, 5
        %s1798 = scalar_select %p1797, %s32, 5
        %s1799 = smul.addr %s1798, 8
        %s1800 = scalar_lea.vmem %s10, %s1799
        // Predicated region
        $region85: #{tpu_custom_call.1} parent=55 // pred_check
          %p1801 = pneg %p264
        $region86: #{tpu_custom_call.1} parent=55 // pred_check_branch
          %1803 = sbr.rel (%p1801) target = $region88
        $region87: #{tpu_custom_call.1} parent=55 // pred_region
          %s1805 = ssub.s32 16, 16
          %1806 = vsyncadd [#allocation5], %s1805
          %s1808 = sshll.u32 [#allocation11], 4
          %s1809 = int_to_ptr.vmem [resolvable:$true] %s1808
          %1811 = dma.vmem_to_hbm [thread:$0]  %s1809, 16, %s9, [#allocation5]
        $region88: #{tpu_custom_call.1} parent=55 // pred_fallthru
          _
        // Predicated region
        $region89: #{tpu_custom_call.1} parent=55 // pred_check
          %p1812 = pneg %p290
        $region90: #{tpu_custom_call.1} parent=55 // pred_check_branch
          %1814 = sbr.rel (%p1812) target = $region92
        $region91: #{tpu_custom_call.1} parent=55 // pred_region
          _
        $region92: #{tpu_custom_call.1} parent=55 // pred_fallthru
          _
        // Predicated region
        $region93: #{tpu_custom_call.1} parent=55 // pred_check
          %p1815 = pneg %p264
        $region94: #{tpu_custom_call.1} parent=55 // pred_check_branch
          %1817 = sbr.rel (%p1815) target = $region96
        $region95: #{tpu_custom_call.1} parent=55 // pred_region
          %1818 = dma.done [#allocation5], 16
        $region96: #{tpu_custom_call.1} parent=55 // pred_fallthru
          _
      $region56: #{tpu_custom_call.1} parent=5 // pred_fallthru
        _
      %p1819 = scmp.le.s32.totalorder 2, %s27
      // Predicated region
      $region97: #{tpu_custom_call.1} parent=5 // pred_check
        %p1820 = pneg %p1819
      $region98: #{tpu_custom_call.1} parent=5 // pred_check_branch
        %1822 = sbr.rel (%p1820) target = $region100
      $region99: #{tpu_custom_call.1} parent=5 // pred_region
        %s1823 = ssub.s32 %s27, 2
        // Predicated region
        $region101: #{tpu_custom_call.1} parent=99 // pred_check
          %p1824 = pneg %p296
        $region102: #{tpu_custom_call.1} parent=99 // pred_check_branch
          %1826 = sbr.rel (%p1824) target = $region104
        $region103: #{tpu_custom_call.1} parent=99 // pred_region
          %p1827 = scmp.lt.s32.totalorder %s33, 5
          %s1828 = scalar_select %p1827, %s33, 5
          %s1829 = smul.addr %s1828, 8
          %s1830 = scalar_lea.vmem %s10, %s1829
        $region104: #{tpu_custom_call.1} parent=99 // pred_fallthru
          _
      $region100: #{tpu_custom_call.1} parent=5 // pred_fallthru
        _
    $region6: #{tpu_custom_call.1} parent=1 // loop_footer
      %s31 = sadd.s32 1, %s27
    $region7: #{tpu_custom_call.1} parent=1 // loop_footer_branch
      %26 = sbr.rel target = $region3
    $region8: #{tpu_custom_call.1} parent=1 // loop_exit
      _
    %1831 = vsyncpa [#allocation4], 1
    %s1832 = scalar_lea.sflag [#allocation4], 1
    %1833 = vsyncpa %s1832, 1
    %1834 = vsyncpa [#allocation7], 1
    %s1835 = scalar_lea.sflag [#allocation7], 1
    %1836 = vsyncpa %s1835, 1
    %1837 = vsyncpa [#allocation10], 1
    %s1838 = scalar_lea.sflag [#allocation10], 1
    %1839 = vsyncpa %s1838, 1
    %1840 = vsyncpa [#allocation5], 1
    %s1841 = scalar_lea.sflag [#allocation5], 1
    %1842 = vsyncpa %s1841, 1

</llo_original>
